<compile_context>
chip_gen: v7x
topology: tpu7x:2x2x1
jax: 0.10.0
libtpu: 0.0.40
codegen_flags: <defaults>
</compile_context>

<pallas_src>
import jax
import jax.numpy as jnp
from jax.experimental import pallas as pl
from jax.experimental.pallas import tpu as pltpu

BN_EPS = 1e-5
LANE = 128


def _round_up(x, m):
    return ((x + m - 1) // m) * m


# --------------------------------- Pallas kernel --------------------------------- #
def _make_chain_kernel(tm, tk, compute_dtype, external_residual, snapshot_residual):
    """Fused GraphConv(+folded BN/bias) chain with optional residual add.

    Grid = (L, T, K):
      L : layer index        (sequential; layers chain through the h VMEM scratch)
      T : dst-node row tiles (adjacency rows streamed, double-buffered by BlockSpec)
      K : src-node col tiles (adjacency columns; reduction into the acc scratch)
    """

    def kernel(*refs):
        it = iter(refs)
        adj_ref = next(it)                                    # (tm, tk)  bf16
        x_ref = next(it)                                      # (Np, Fp)  bf16 (resident)
        res_ref = next(it) if external_residual else None     # (tm, Fp)  f32
        w_ref = next(it)                                      # (1, Fp, Fp) bf16 (layer l)
        b_ref = next(it)                                      # (1, 1, Fp)  f32  (layer l)
        out_ref = next(it)                                    # (tm, Fp)  f32
        h_ref = next(it)                                      # (Np, Fp)  f32  activation
        xw_ref = next(it)                                     # (Np, Fp)  bf16 H @ W'
        acc_ref = next(it)                                    # (tm, Fp)  f32  accumulator
        snap_ref = next(it) if snapshot_residual else None    # (Np, Fp)  f32

        l = pl.program_id(0)
        i = pl.program_id(1)
        k = pl.program_id(2)
        last_l = pl.num_programs(0) - 1
        last_k = pl.num_programs(2) - 1
        row = pl.multiple_of(i * tm, tm)
        col = pl.multiple_of(k * tk, tk)

        # ---- once per layer (its very first grid step): XW = H @ W' over ALL rows
        @pl.when((i == 0) & (k == 0))
        def _():
            w = w_ref[0]

            @pl.when(l == 0)
            def _():
                xw_ref[...] = jnp.dot(
                    x_ref[...], w,
                    preferred_element_type=jnp.float32).astype(compute_dtype)

            @pl.when(l != 0)
            def _():
                xw_ref[...] = jnp.dot(
                    h_ref[...].astype(compute_dtype), w,
                    preferred_element_type=jnp.float32).astype(compute_dtype)

        # ---- stream adjacency tiles: acc += A_hat[row tile, col tile] @ XW[col tile]
        @pl.when(k == 0)
        def _():
            acc_ref[...] = jnp.zeros_like(acc_ref)

        acc_ref[...] += jnp.dot(adj_ref[...], xw_ref[pl.ds(col, tk), :],
                                preferred_element_type=jnp.float32)

        # ---- finalize this destination row tile of layer l
        @pl.when(k == last_k)
        def _():
            h_new = acc_ref[...] + b_ref[0]            # folded GraphConv bias + BN
            h_ref[pl.ds(row, tm), :] = h_new           # feeds the next layer's XW

            if snapshot_residual:
                @pl.when(l == 0)
                def _():
                    snap_ref[pl.ds(row, tm), :] = h_new

            @pl.when(l == last_l)
            def _():
                if external_residual:
                    out_ref[...] = h_new + res_ref[...]
                elif snapshot_residual:
                    out_ref[...] = h_new + snap_ref[pl.ds(row, tm), :]
                else:
                    out_ref[...] = h_new

            @pl.when(l != last_l)
            def _():
                out_ref[...] = h_new   # defined data; overwritten by later layers

    return kernel


# --------------------------------- host helpers ----------------------------------- #
def _fold_bn(p):
    """Fold eval-mode BatchNorm + GraphConv bias into (W', b') in float32."""
    scale = p["gamma"] * jax.lax.rsqrt(p["rv"] + BN_EPS)           # (1, F_out)
    w_f = p["w"] * scale                                           # column-wise scale
    b_f = (p["b"] - p["rm"]) * scale + p["beta"]                   # (1, F_out)
    return w_f.astype(jnp.float32), b_f.astype(jnp.float32)


def residual_chain(adj_norm, x, layer_params, *, residual=None,
                   snapshot_residual=False, tm=128, tk=128,
                   compute_dtype=jnp.bfloat16):
    """Run a chain of GraphConvDropoutBatch layers (+ residual add) in ONE pallas_call."""
    n, fin = x.shape
    num_layers = len(layer_params)
    fout = layer_params[-1]["w"].shape[1]
    fmax = max([fin] + [s for p in layer_params for s in p["w"].shape])
    fp = _round_up(fmax, LANE)                       # lane-dense feature width
    np_ = _round_up(n, max(tm, tk, LANE))            # padded node count
    assert np_ % tm == 0 and np_ % tk == 0

    # Fold BN + bias, pad every layer to a common (Fp, Fp) and stack -> one DMA.
    ws, bs = [], []
    for p in layer_params:
        w_f, b_f = _fold_bn(p)
        fi, fo = w_f.shape
        ws.append(jnp.pad(w_f, ((0, fp - fi), (0, fp - fo))))
        bs.append(jnp.pad(b_f, ((0, 0), (0, fp - fo))))
    w_stack = jnp.stack(ws).astype(compute_dtype)     # (L, Fp, Fp) bf16
    b_stack = jnp.stack(bs).astype(jnp.float32)       # (L, 1, Fp)  f32

    adj_p = jnp.pad(adj_norm, ((0, np_ - n), (0, np_ - n))).astype(compute_dtype)
    x_p = jnp.pad(x, ((0, np_ - n), (0, fp - fin))).astype(compute_dtype)

    external_residual = residual is not None
    operands = [adj_p, x_p]
    in_specs = [
        pl.BlockSpec((tm, tk), lambda l, i, k: (i, k)),      # adjacency tiles (streamed)
        pl.BlockSpec((np_, fp), lambda l, i, k: (0, 0)),     # input feats, VMEM resident
    ]
    if external_residual:
        res_p = jnp.pad(residual.astype(jnp.float32),
                        ((0, np_ - n), (0, fp - residual.shape[1])))
        operands.append(res_p)
        # Park on block 0 until the last layer so each tile is DMA'd exactly once.
        in_specs.append(pl.BlockSpec(
            (tm, fp),
            lambda l, i, k: (jnp.where(l == num_layers - 1, i, 0), 0)))
    operands += [w_stack, b_stack]
    in_specs += [
        pl.BlockSpec((1, fp, fp), lambda l, i, k: (l, 0, 0)),   # W' of layer l
        pl.BlockSpec((1, 1, fp), lambda l, i, k: (l, 0, 0)),    # b' of layer l
    ]

    scratch_shapes = [
        pltpu.VMEM((np_, fp), jnp.float32),      # h   : inter-layer activation
        pltpu.VMEM((np_, fp), compute_dtype),    # xw  : H @ W' of current layer
        pltpu.VMEM((tm, fp), jnp.float32),       # acc : per-row-tile accumulator
    ]
    if snapshot_residual:
        scratch_shapes.append(pltpu.VMEM((np_, fp), jnp.float32))  # layer-0 snapshot

    grid = (num_layers, np_ // tm, np_ // tk)

    flops = num_layers * (2 * np_ * fp * fp + 2 * np_ * np_ * fp)
    bytes_accessed = (num_layers * np_ * np_ * 2        # adjacency (re-streamed / layer)
                      + np_ * fp * 2                    # x
                      + num_layers * (fp * fp * 2 + fp * 4)
                      + 2 * np_ * fp * 4)               # residual + output

    kernel = _make_chain_kernel(tm, tk, compute_dtype,
                                external_residual, snapshot_residual)

    out_p = pl.pallas_call(
        kernel,
        out_shape=jax.ShapeDtypeStruct((np_, fp), jnp.float32),
        grid=grid,
        in_specs=in_specs,
        out_specs=pl.BlockSpec((tm, fp), lambda l, i, k: (i, 0)),
        scratch_shapes=scratch_shapes,
        compiler_params=pltpu.CompilerParams(
            # Row/col axes feed & read the shared h scratch across layers, so all
            # axes stay "arbitrary" (megacore VMEM is per-core; see TODO above).
            dimension_semantics=("arbitrary", "arbitrary", "arbitrary"),
            vmem_limit_bytes=32 * 1024 * 1024,
        ),
        cost_estimate=pl.CostEstimate(flops=flops, transcendentals=0,
                                      bytes_accessed=bytes_accessed),
    )(*operands)

    return out_p[:n, :fout]


def residual_block_homo(adj_norm, feat, layer_params, input_block=False, **kw):
    if input_block:
        # h0 = layer0(x); out = layers[1:](h0) + h0 -- fused in ONE pallas_call,
        # the layer-0 snapshot never leaves VMEM.
        return residual_chain(adj_norm, feat, layer_params,
                              snapshot_residual=True, **kw)
    return residual_chain(adj_norm, feat, layer_params, residual=feat, **kw)


# --------------------------------- pure-JAX references ----------------------------- #
def _layer_ref(adj_norm, x, p):
    h = adj_norm @ (x @ p["w"]) + p["b"]
    return (h - p["rm"]) * jax.lax.rsqrt(p["rv"] + BN_EPS) * p["gamma"] + p["beta"]


def _block_ref(adj_norm, feat, layer_params, input_block=False):
    if input_block:
        h0 = _layer_ref(adj_norm, feat, layer_params[0])
        h = h0
        for p in layer_params[1:]:
            h = _layer_ref(adj_norm, h, p)
        return h0 + h
    h = feat
    for p in layer_params:
        h = _layer_ref(adj_norm, h, p)
    return h + feat


def _block_ref_bf16_matched(adj_norm, feat, layer_params):
    """Same rounding as the kernel (bf16 operands, f32 accumulation) for a tight check."""
    adj_bf = adj_norm.astype(jnp.bfloat16)
    h = feat
    for p in layer_params:
        w_f, b_f = _fold_bn(p)
        xw = jnp.dot(h.astype(jnp.bfloat16), w_f.astype(jnp.bfloat16),
                     preferred_element_type=jnp.float32).astype(jnp.bfloat16)
        h = jnp.dot(adj_bf, xw, preferred_element_type=jnp.float32) + b_f
    return h + feat


# --------------------------------------- main --------------------------------------- #
if __name__ == "__main__":
    N, F = 256, 64                 # nodes, feature dim (in_feats == out_feats)
    RESID_N_GRAPH_CONVS = 2

    key = jax.random.PRNGKey(0)
    k_adj, k_feat, *k_layers = jax.random.split(key, 2 + RESID_N_GRAPH_CONVS)

    # Deterministic random graph with self-loops; A[dst, src].
    adj = jax.random.bernoulli(k_adj, p=0.05, shape=(N, N)).astype(jnp.float32)
    adj = jnp.maximum(adj, jnp.eye(N, dtype=jnp.float32))
    deg_in = jnp.clip(adj.sum(axis=1), 1.0)                  # per dst
    deg_out = jnp.clip(adj.sum(axis=0), 1.0)                 # per src
    # norm='both':  A_hat = D_in^{-1/2} A D_out^{-1/2}
    adj_norm = adj * jax.lax.rsqrt(deg_in)[:, None] * jax.lax.rsqrt(deg_out)[None, :]

    feat = jax.random.normal(k_feat, (N, F), dtype=jnp.float32)

    # Deterministic synthetic parameters for each GraphConvDropoutBatch layer.
    layer_params = []
    for kl in k_layers:
        kw_, kb, kg, kbe, km, kv = jax.random.split(kl, 6)
        scale = (6.0 / (F + F)) ** 0.5                       # xavier-uniform-ish
        layer_params.append(dict(
            w=jax.random.uniform(kw_, (F, F), jnp.float32, -scale, scale),
            b=jax.random.normal(kb, (1, F), jnp.float32) * 0.01,
            gamma=1.0 + 0.05 * jax.random.normal(kg, (1, F), jnp.float32),
            beta=0.05 * jax.random.normal(kbe, (1, F), jnp.float32),
            rm=0.05 * jax.random.normal(km, (1, F), jnp.float32),
            rv=1.0 + 0.05 * jax.random.uniform(kv, (1, F), jnp.float32),
        ))

    # ---- standard residual block (input_block=False): out = L2(L1(x)) + x
    out = residual_block_homo(adj_norm, feat, layer_params, input_block=False)
    out = jax.block_until_ready(out)
    assert out.shape == (N, F) and out.dtype == jnp.float32

    ref_f32 = _block_ref(adj_norm, feat, layer_params, input_block=False)
    ref_matched = _block_ref_bf16_matched(adj_norm, feat, layer_params)
    # Tight check vs a reference with identical bf16 rounding / f32 accumulation.
    assert jnp.allclose(out, ref_matched, rtol=1e-2, atol=1e-2), "mismatch (matched ref)"
    # Loose check vs exact f32 module semantics (bf16 operand rounding in kernel).
    assert jnp.allclose(out, ref_f32, rtol=5e-2, atol=5e-2), "mismatch (f32 ref)"

    # ---- input block (input_block=True): out = L2(L1(x)) + L1(x), single fused call
    out_ib = residual_block_homo(adj_norm, feat, layer_params, input_block=True)
    out_ib = jax.block_until_ready(out_ib)
    ref_ib = _block_ref(adj_norm, feat, layer_params, input_block=True)
    assert out_ib.shape == (N, F)
    assert jnp.allclose(out_ib, ref_ib, rtol=5e-2, atol=5e-2), "mismatch (input_block)"

    print("KERNEL_OK")
</pallas_src>

<mosaic_0001>
module attributes {stable_mosaic.version = 11 : i64} {
  func.func @kernel(%arg0: i32, %arg1: i32, %arg2: i32, %arg3: memref<128x128xbf16, #tpu.memory_space<vmem>>, %arg4: memref<256x128xbf16, #tpu.memory_space<vmem>>, %arg5: memref<128x128xf32, #tpu.memory_space<vmem>>, %arg6: memref<1x128x128xbf16, #tpu.memory_space<vmem>>, %arg7: memref<1x1x128xf32, #tpu.memory_space<vmem>>, %arg8: memref<128x128xf32, #tpu.memory_space<vmem>>, %arg9: memref<256x128xf32, #tpu.memory_space<vmem>>, %arg10: memref<256x128xbf16, #tpu.memory_space<vmem>>, %arg11: memref<128x128xf32, #tpu.memory_space<vmem>>) attributes {dimension_semantics = [#tpu.dimension_semantics<arbitrary>, #tpu.dimension_semantics<arbitrary>, #tpu.dimension_semantics<arbitrary>], iteration_bounds = array<i64: 2, 2, 2>, scalar_prefetch = 0 : i64, scratch_operands = 3 : i64, tpu.core_type = #tpu.core_type<tc>, window_params = [{transform_indices = @transform_0, window_bounds = array<i64: 128, 128>}, {pipeline_mode = #tpu.pipeline_mode<synchronous>, transform_indices = @transform_1, window_bounds = array<i64: 256, 128>}, {transform_indices = @transform_2, window_bounds = array<i64: 128, 128>}, {transform_indices = @transform_3, window_bounds = array<i64: 1, 128, 128>}, {transform_indices = @transform_4, window_bounds = array<i64: 1, 1, 128>}, {transform_indices = @transform_5, window_bounds = array<i64: 128, 128>}]} {
    %c128_i32 = arith.constant 128 : i32
    %0 = arith.muli %arg1, %c128_i32 : i32
    %1 = tpu.assume_multiple %0, 128 : i32
    %c128_i32_0 = arith.constant 128 : i32
    %2 = arith.muli %arg2, %c128_i32_0 : i32
    %3 = tpu.assume_multiple %2, 128 : i32
    %c0_i32 = arith.constant 0 : i32
    %4 = arith.cmpi eq, %arg1, %c0_i32 : i32
    %c0_i32_1 = arith.constant 0 : i32
    %5 = arith.cmpi eq, %arg2, %c0_i32_1 : i32
    %6 = arith.andi %4, %5 : i1
    %7 = arith.extui %6 : i1 to i32
    %c0_i32_2 = arith.constant 0 : i32
    %8 = arith.cmpi ne, %7, %c0_i32_2 : i32
    scf.if %8 {
      %c0_12 = arith.constant 0 : index
      %c0_13 = arith.constant 0 : index
      %c0_14 = arith.constant 0 : index
      %22 = vector.load %arg6[%c0_12, %c0_13, %c0_14] : memref<1x128x128xbf16, #tpu.memory_space<vmem>>, vector<1x128x128xbf16>
      %23 = vector.shape_cast %22 : vector<1x128x128xbf16> to vector<128x128xbf16>
      %c0_i32_15 = arith.constant 0 : i32
      %24 = arith.cmpi eq, %arg0, %c0_i32_15 : i32
      %25 = arith.extui %24 : i1 to i32
      %c0_i32_16 = arith.constant 0 : i32
      %26 = arith.cmpi ne, %25, %c0_i32_16 : i32
      scf.if %26 {
        %c0_19 = arith.constant 0 : index
        %c0_20 = arith.constant 0 : index
        %30 = vector.load %arg4[%c0_19, %c0_20] : memref<256x128xbf16, #tpu.memory_space<vmem>>, vector<256x128xbf16>
        %cst_21 = arith.constant dense<0.000000e+00> : vector<256x128xf32>
        %31 = tpu.matmul %30, %23, %cst_21 {dimension_numbers = #tpu.dot_dimension_numbers<[1], [0], [0], [1], [0, 0, 1, 1], [], []>} : vector<256x128xbf16>, vector<128x128xbf16>, vector<256x128xf32> -> vector<256x128xf32>
        %32 = arith.truncf %31 : vector<256x128xf32> to vector<256x128xbf16>
        %c0_22 = arith.constant 0 : index
        %c0_23 = arith.constant 0 : index
        %33 = vector.load %arg10[%c0_22, %c0_23] : memref<256x128xbf16, #tpu.memory_space<vmem>>, vector<256x128xbf16>
        tpu.vector_store %arg10[%c0_22, %c0_23], %32 {strides = array<i32>} : memref<256x128xbf16, #tpu.memory_space<vmem>>, vector<256x128xbf16>,
      } else {
      }
      %c0_i32_17 = arith.constant 0 : i32
      %27 = arith.cmpi ne, %arg0, %c0_i32_17 : i32
      %28 = arith.extui %27 : i1 to i32
      %c0_i32_18 = arith.constant 0 : i32
      %29 = arith.cmpi ne, %28, %c0_i32_18 : i32
      scf.if %29 {
        %c0_19 = arith.constant 0 : index
        %c0_20 = arith.constant 0 : index
        %30 = vector.load %arg9[%c0_19, %c0_20] : memref<256x128xf32, #tpu.memory_space<vmem>>, vector<256x128xf32>
        %31 = arith.truncf %30 : vector<256x128xf32> to vector<256x128xbf16>
        %cst_21 = arith.constant dense<0.000000e+00> : vector<256x128xf32>
        %32 = tpu.matmul %31, %23, %cst_21 {dimension_numbers = #tpu.dot_dimension_numbers<[1], [0], [0], [1], [0, 0, 1, 1], [], []>} : vector<256x128xbf16>, vector<128x128xbf16>, vector<256x128xf32> -> vector<256x128xf32>
        %33 = arith.truncf %32 : vector<256x128xf32> to vector<256x128xbf16>
        %c0_22 = arith.constant 0 : index
        %c0_23 = arith.constant 0 : index
        %34 = vector.load %arg10[%c0_22, %c0_23] : memref<256x128xbf16, #tpu.memory_space<vmem>>, vector<256x128xbf16>
        tpu.vector_store %arg10[%c0_22, %c0_23], %33 {strides = array<i32>} : memref<256x128xbf16, #tpu.memory_space<vmem>>, vector<256x128xbf16>,
      } else {
      }
    } else {
    }
    %c0_i32_3 = arith.constant 0 : i32
    %9 = arith.cmpi eq, %arg2, %c0_i32_3 : i32
    %10 = arith.extui %9 : i1 to i32
    %c0_i32_4 = arith.constant 0 : i32
    %11 = arith.cmpi ne, %10, %c0_i32_4 : i32
    scf.if %11 {
      %cst_12 = arith.constant 0.000000e+00 : f32
      %22 = vector.broadcast %cst_12 : f32 to vector<128x128xf32>
      %c0_13 = arith.constant 0 : index
      %c0_14 = arith.constant 0 : index
      %23 = vector.load %arg11[%c0_13, %c0_14] : memref<128x128xf32, #tpu.memory_space<vmem>>, vector<128x128xf32>
      tpu.vector_store %arg11[%c0_13, %c0_14], %22 {strides = array<i32>} : memref<128x128xf32, #tpu.memory_space<vmem>>, vector<128x128xf32>,
    } else {
    }
    %c0 = arith.constant 0 : index
    %c0_5 = arith.constant 0 : index
    %12 = vector.load %arg11[%c0, %c0_5] : memref<128x128xf32, #tpu.memory_space<vmem>>, vector<128x128xf32>
    %c0_6 = arith.constant 0 : index
    %c0_7 = arith.constant 0 : index
    %13 = vector.load %arg3[%c0_6, %c0_7] : memref<128x128xbf16, #tpu.memory_space<vmem>>, vector<128x128xbf16>
    %14 = arith.index_cast %3 : i32 to index
    %c0_8 = arith.constant 0 : index
    %15 = vector.load %arg10[%14, %c0_8] : memref<256x128xbf16, #tpu.memory_space<vmem>>, vector<128x128xbf16>
    %cst = arith.constant dense<0.000000e+00> : vector<128x128xf32>
    %16 = tpu.matmul %13, %15, %cst {dimension_numbers = #tpu.dot_dimension_numbers<[1], [0], [0], [1], [0, 0, 1, 1], [], []>} : vector<128x128xbf16>, vector<128x128xbf16>, vector<128x128xf32> -> vector<128x128xf32>
    %17 = arith.addf %12, %16 : vector<128x128xf32>
    %c0_9 = arith.constant 0 : index
    %c0_10 = arith.constant 0 : index
    %18 = vector.load %arg11[%c0_9, %c0_10] : memref<128x128xf32, #tpu.memory_space<vmem>>, vector<128x128xf32>
    tpu.vector_store %arg11[%c0_9, %c0_10], %17 {strides = array<i32>} : memref<128x128xf32, #tpu.memory_space<vmem>>, vector<128x128xf32>,
    %c1_i32 = arith.constant 1 : i32
    %19 = arith.cmpi eq, %arg2, %c1_i32 : i32
    %20 = arith.extui %19 : i1 to i32
    %c0_i32_11 = arith.constant 0 : i32
    %21 = arith.cmpi ne, %20, %c0_i32_11 : i32
    scf.if %21 {
      %c0_12 = arith.constant 0 : index
      %c0_13 = arith.constant 0 : index
      %22 = vector.load %arg11[%c0_12, %c0_13] : memref<128x128xf32, #tpu.memory_space<vmem>>, vector<128x128xf32>
      %c0_14 = arith.constant 0 : index
      %c0_15 = arith.constant 0 : index
      %c0_16 = arith.constant 0 : index
      %23 = vector.load %arg7[%c0_14, %c0_15, %c0_16] : memref<1x1x128xf32, #tpu.memory_space<vmem>>, vector<1x1x128xf32>
      %24 = vector.shape_cast %23 : vector<1x1x128xf32> to vector<1x128xf32>
      %25 = vector.broadcast %24 : vector<1x128xf32> to vector<128x128xf32>
      %26 = arith.addf %22, %25 : vector<128x128xf32>
      %27 = arith.index_cast %1 : i32 to index
      %c0_17 = arith.constant 0 : index
      %28 = vector.load %arg9[%27, %c0_17] : memref<256x128xf32, #tpu.memory_space<vmem>>, vector<128x128xf32>
      tpu.vector_store %arg9[%27, %c0_17], %26 {strides = array<i32>} : memref<256x128xf32, #tpu.memory_space<vmem>>, vector<128x128xf32>,
      %c1_i32_18 = arith.constant 1 : i32
      %29 = arith.cmpi eq, %arg0, %c1_i32_18 : i32
      %30 = arith.extui %29 : i1 to i32
      %c0_i32_19 = arith.constant 0 : i32
      %31 = arith.cmpi ne, %30, %c0_i32_19 : i32
      scf.if %31 {
        %c0_22 = arith.constant 0 : index
        %c0_23 = arith.constant 0 : index
        %35 = vector.load %arg5[%c0_22, %c0_23] : memref<128x128xf32, #tpu.memory_space<vmem>>, vector<128x128xf32>
        %36 = arith.addf %26, %35 : vector<128x128xf32>
        %c0_24 = arith.constant 0 : index
        %c0_25 = arith.constant 0 : index
        %37 = vector.load %arg8[%c0_24, %c0_25] : memref<128x128xf32, #tpu.memory_space<vmem>>, vector<128x128xf32>
        tpu.vector_store %arg8[%c0_24, %c0_25], %36 {strides = array<i32>} : memref<128x128xf32, #tpu.memory_space<vmem>>, vector<128x128xf32>,
      } else {
      }
      %c1_i32_20 = arith.constant 1 : i32
      %32 = arith.cmpi ne, %arg0, %c1_i32_20 : i32
      %33 = arith.extui %32 : i1 to i32
      %c0_i32_21 = arith.constant 0 : i32
      %34 = arith.cmpi ne, %33, %c0_i32_21 : i32
      scf.if %34 {
        %c0_22 = arith.constant 0 : index
        %c0_23 = arith.constant 0 : index
        %35 = vector.load %arg8[%c0_22, %c0_23] : memref<128x128xf32, #tpu.memory_space<vmem>>, vector<128x128xf32>
        tpu.vector_store %arg8[%c0_22, %c0_23], %26 {strides = array<i32>} : memref<128x128xf32, #tpu.memory_space<vmem>>, vector<128x128xf32>,
      } else {
      }
    } else {
    }
    return
  }
  func.func @transform_0(%arg0: i32, %arg1: i32, %arg2: i32) -> (i32, i32) {
    %c0_i32 = arith.constant 0 : i32
    return %arg1, %arg2 : i32, i32
  }
  func.func @transform_1(%arg0: i32, %arg1: i32, %arg2: i32) -> (i32, i32) {
    %c0_i32 = arith.constant 0 : i32
    %c0_i32_0 = arith.constant 0 : i32
    %c0_i32_1 = arith.constant 0 : i32
    return %c0_i32, %c0_i32_0 : i32, i32
  }
  func.func @transform_2(%arg0: i32, %arg1: i32, %arg2: i32) -> (i32, i32) {
    %c1_i32 = arith.constant 1 : i32
    %0 = arith.cmpi eq, %arg0, %c1_i32 : i32
    %c0_i32 = arith.constant 0 : i32
    %1 = arith.select %0, %arg1, %c0_i32 : i32
    %c0_i32_0 = arith.constant 0 : i32
    %c0_i32_1 = arith.constant 0 : i32
    return %1, %c0_i32_0 : i32, i32
  }
  func.func @transform_3(%arg0: i32, %arg1: i32, %arg2: i32) -> (i32, i32, i32) {
    %c0_i32 = arith.constant 0 : i32
    %c0_i32_0 = arith.constant 0 : i32
    %c0_i32_1 = arith.constant 0 : i32
    return %arg0, %c0_i32, %c0_i32_0 : i32, i32, i32
  }
  func.func @transform_4(%arg0: i32, %arg1: i32, %arg2: i32) -> (i32, i32, i32) {
    %c0_i32 = arith.constant 0 : i32
    %c0_i32_0 = arith.constant 0 : i32
    %c0_i32_1 = arith.constant 0 : i32
    return %arg0, %c0_i32, %c0_i32_0 : i32, i32, i32
  }
  func.func @transform_5(%arg0: i32, %arg1: i32, %arg2: i32) -> (i32, i32) {
    %c0_i32 = arith.constant 0 : i32
    %c0_i32_0 = arith.constant 0 : i32
    return %arg1, %c0_i32 : i32, i32
  }
}

</mosaic_0001>

<llo_original>
// kernel: tpu_custom_call.1
$region0: #{tpu_custom_call.1}
  #allocation0 [shape = 'u32[]', space=smem, size = 0x4, offset = 0x4, fixed_abs, tag = 'smem constant byte address 0x4 - core index']
  #allocation1 [shape = 'u32[144,128]{1,0:T(1,128)}', space=vmem, size = 0x12000, scoped, tag = 'internal scratch']
  #allocation2 [shape = 'f32[256,128]{1,0:T(8,128)}', space=vmem, size = 0x20000, scoped, tag = 'scratch operand']
  #allocation3 [shape = 'bf16[256,128]{1,0:T(16,128)(2,1)}', space=vmem, size = 0x10000, scoped, tag = 'scratch operand']
  #allocation4 [shape = 'f32[128,128]{1,0:T(8,128)}', space=vmem, size = 0x10000, scoped, tag = 'scratch operand']
  %s0 = inlined_call_operand.hbm [shape: bf16[256,256], index: 0, kind: input, shape index: {}]
  %s1 = inlined_call_operand.hbm [shape: bf16[256,128], index: 1, kind: input, shape index: {}]
  %s2 = inlined_call_operand.hbm [shape: f32[256,128], index: 2, kind: input, shape index: {}]
  %s3 = inlined_call_operand.hbm [shape: bf16[2,128,128], index: 3, kind: input, shape index: {}]
  %s4 = inlined_call_operand.vmem [shape: f32[2,1,128], index: 4, kind: input, shape index: {}]
  %s5 = inlined_call_operand.hbm [shape: f32[256,128], index: 5, kind: output, shape index: {}]
  %s6 = sld [smem:[#allocation0]]
  $region97: #{tpu_custom_call.1} parent=0
    _
  %s8 = ssub.s32 1, %s6
  %s9 = scalar_select 0, %s8, %s6
  $region1: #{tpu_custom_call.1} parent=0
    #allocation5 [shape = 'u8[65536]{0}', space=vmem, size = 0x10000, scoped, tag = 'input window, operand 0']
    #allocation6 [shape = 's32[2]{0}', space=sflag, size = 0x8, scoped, tag = 'scoped memory for tpu_custom_call.1']
    #allocation7 [shape = 's32[2]{0}', space=sflag, size = 0x8, scoped, tag = 'scoped memory for tpu_custom_call.1']
    #allocation8 [shape = 'u8[65536]{0}', space=vmem, size = 0x10000, scoped, tag = 'input window, operand 1, single buffered']
    #allocation9 [shape = 's32[1]{0}', space=sflag, size = 0x4, scoped, tag = 'scoped memory for tpu_custom_call.1']
    #allocation10 [shape = 'u8[131072]{0}', space=vmem, size = 0x20000, scoped, tag = 'input window, operand 2']
    #allocation11 [shape = 'u8[65536]{0}', space=vmem, size = 0x10000, scoped, tag = 'input window, operand 3']
    #allocation12 [shape = 'u8[131072]{0}', space=vmem, size = 0x20000, scoped, tag = 'output window, operand 0']
    %10 = vsyncpa [#allocation6], 0
    %s11 = scalar_lea.sflag [#allocation6], 1
    %12 = vsyncpa %s11, 0
    %13 = vsyncpa [#allocation9], 0
    %14 = vsyncpa [#allocation7], 0
    %s15 = scalar_lea.sflag [#allocation7], 1
    %16 = vsyncpa %s15, 0
    loop: start=0, step=1, limit=10
    $region2: #{tpu_custom_call.1} parent=1 // loop_pre_header
      _
    $region3: #{tpu_custom_call.1} parent=1 // loop_header
      %s18 = sphi 0, %s22
      %p19 = scmp.ge.s32.totalorder %s18, 10
      %s25 = sphi 0, %s44
      %s26 = sphi 0, %s40
      %s27 = sphi 0, %s36
      %s28 = sphi 0, %s25
      %s29 = sphi 0, %s26
      %s30 = sphi 0, %s27
      %s31 = sphi 0, %s28
      %s32 = sphi 0, %s29
      %s33 = sphi 0, %s30
      %s49 = sphi 0, %s51
      %s52 = sphi 0, %s49
      %s53 = sphi 0, %s52
      %s69 = sphi 0, %s53
      %s73 = sphi 0, %s73
      %s75 = sphi 0, %s73
      %s76 = sphi 0, %s75
      %s90 = sphi 0, %s76
      %s100 = sphi 0, %s102
      %s103 = sphi 0, %s100
      %s104 = sphi 0, %s103
      %s120 = sphi 0, %s104
      %s126 = sphi 0, %s128
      %s129 = sphi 0, %s126
      %s130 = sphi 0, %s129
      %s146 = sphi 0, %s130
      %s152 = sphi 0, %s154
      %s155 = sphi 0, %s152
      %s156 = sphi 0, %s155
      %s172 = sphi 0, %s156
      %s178 = sphi 0, %s180
      %s181 = sphi 0, %s178
      %s182 = sphi 0, %s181
      %s198 = sphi 0, %s182
    $region4: #{tpu_custom_call.1} parent=1 // loop_header_branch
      %21 = sbr.rel (%p19) target = $region8
    $region5: #{tpu_custom_call.1} parent=1 // loop_body
      %s23 = ssub.s32 %s18, 1
      %s24 = ssub.s32 %s18, 2
      %s34 = sadd.s32 1, %s27
      %p35 = scmp.ge.s32.totalorder %s34, 2
      %s36 = scalar_select %p35, 0, %s34
      %s37 = sadd.s32 1, %s26
      %s38 = scalar_select %p35, %s37, %s26
      %p39 = scmp.ge.s32.totalorder %s38, 2
      %s40 = scalar_select %p39, 0, %s38
      %s41 = sadd.s32 1, %s25
      %s42 = scalar_select %p39, %s41, %s25
      %p43 = scmp.ge.s32.totalorder %s42, 2
      %s44 = scalar_select %p43, 0, %s42
      %s45 = ssub.s32 %s26, %s40
      %s46 = ssub.s32 %s27, %s36
      %s47 = sor.u32 %s45, %s46
      %p48 = scmp.eq.s32.totalorder %s47, 0
      %s50 = sadd.s32 %s49, 1
      %s51 = scalar_select %p48, %s49, %s50
      %p54 = pneg %p48
      %p55 = scmp.eq.s32.totalorder %s18, 7
      %p56 = por %p54, %p55
      %p57 = scmp.ne.s32.totalorder %s49, %s52
      %p58 = scmp.eq.s32.totalorder %s18, 0
      %p59 = por %p57, %p58
      %p60 = scmp.ne.s32.totalorder %s49, %s52
      %p61 = scmp.eq.s32.totalorder %s23, 7
      %p62 = por %p60, %p61
      %p63 = scmp.ne.s32.totalorder %s52, %s53
      %p64 = scmp.eq.s32.totalorder %s23, 0
      %p65 = por %p63, %p64
      %p66 = scmp.ne.s32.totalorder %s52, %s53
      %p67 = scmp.eq.s32.totalorder %s24, 7
      %p68 = por %p66, %p67
      %p70 = scmp.ne.s32.totalorder %s53, %s69
      %p71 = scmp.eq.s32.totalorder %s24, 0
      %p72 = por %p70, %p71
      %s74 = sadd.s32 %s73, 1
      %p77 = scmp.eq.s32.totalorder %s18, 7
      %p78 = scmp.ne.s32.totalorder %s73, %s75
      %p79 = scmp.eq.s32.totalorder %s18, 0
      %p80 = por %p78, %p79
      %p81 = scmp.ne.s32.totalorder %s73, %s75
      %p82 = scmp.eq.s32.totalorder %s23, 7
      %p83 = por %p81, %p82
      %p84 = scmp.ne.s32.totalorder %s75, %s76
      %p85 = scmp.eq.s32.totalorder %s23, 0
      %p86 = por %p84, %p85
      %p87 = scmp.ne.s32.totalorder %s75, %s76
      %p88 = scmp.eq.s32.totalorder %s24, 7
      %p89 = por %p87, %p88
      %p91 = scmp.ne.s32.totalorder %s76, %s90
      %p92 = scmp.eq.s32.totalorder %s24, 0
      %p93 = por %p91, %p92
      %p94 = scmp.eq.s32.totalorder %s25, 1
      %s95 = scalar_select %p94, %s26, 0
      %p96 = scmp.eq.s32.totalorder %s44, 1
      %s97 = scalar_select %p96, %s40, 0
      %s98 = ssub.s32 %s95, %s97
      %p99 = scmp.eq.s32.totalorder %s98, 0
      %s101 = sadd.s32 %s100, 1
      %s102 = scalar_select %p99, %s100, %s101
      %p105 = pneg %p99
      %p106 = scmp.eq.s32.totalorder %s18, 7
      %p107 = por %p105, %p106
      %p108 = scmp.ne.s32.totalorder %s100, %s103
      %p109 = scmp.eq.s32.totalorder %s18, 0
      %p110 = por %p108, %p109
      %p111 = scmp.ne.s32.totalorder %s100, %s103
      %p112 = scmp.eq.s32.totalorder %s23, 7
      %p113 = por %p111, %p112
      %p114 = scmp.ne.s32.totalorder %s103, %s104
      %p115 = scmp.eq.s32.totalorder %s23, 0
      %p116 = por %p114, %p115
      %p117 = scmp.ne.s32.totalorder %s103, %s104
      %p118 = scmp.eq.s32.totalorder %s24, 7
      %p119 = por %p117, %p118
      %p121 = scmp.ne.s32.totalorder %s104, %s120
      %p122 = scmp.eq.s32.totalorder %s24, 0
      %p123 = por %p121, %p122
      %s124 = ssub.s32 %s25, %s44
      %p125 = scmp.eq.s32.totalorder %s124, 0
      %s127 = sadd.s32 %s126, 1
      %s128 = scalar_select %p125, %s126, %s127
      %p131 = pneg %p125
      %p132 = scmp.eq.s32.totalorder %s18, 7
      %p133 = por %p131, %p132
      %p134 = scmp.ne.s32.totalorder %s126, %s129
      %p135 = scmp.eq.s32.totalorder %s18, 0
      %p136 = por %p134, %p135
      %p137 = scmp.ne.s32.totalorder %s126, %s129
      %p138 = scmp.eq.s32.totalorder %s23, 7
      %p139 = por %p137, %p138
      %p140 = scmp.ne.s32.totalorder %s129, %s130
      %p141 = scmp.eq.s32.totalorder %s23, 0
      %p142 = por %p140, %p141
      %p143 = scmp.ne.s32.totalorder %s129, %s130
      %p144 = scmp.eq.s32.totalorder %s24, 7
      %p145 = por %p143, %p144
      %p147 = scmp.ne.s32.totalorder %s130, %s146
      %p148 = scmp.eq.s32.totalorder %s24, 0
      %p149 = por %p147, %p148
      %s150 = ssub.s32 %s25, %s44
      %p151 = scmp.eq.s32.totalorder %s150, 0
      %s153 = sadd.s32 %s152, 1
      %s154 = scalar_select %p151, %s152, %s153
      %p157 = pneg %p151
      %p158 = scmp.eq.s32.totalorder %s18, 7
      %p159 = por %p157, %p158
      %p160 = scmp.ne.s32.totalorder %s152, %s155
      %p161 = scmp.eq.s32.totalorder %s18, 0
      %p162 = por %p160, %p161
      %p163 = scmp.ne.s32.totalorder %s152, %s155
      %p164 = scmp.eq.s32.totalorder %s23, 7
      %p165 = por %p163, %p164
      %p166 = scmp.ne.s32.totalorder %s155, %s156
      %p167 = scmp.eq.s32.totalorder %s23, 0
      %p168 = por %p166, %p167
      %p169 = scmp.ne.s32.totalorder %s155, %s156
      %p170 = scmp.eq.s32.totalorder %s24, 7
      %p171 = por %p169, %p170
      %p173 = scmp.ne.s32.totalorder %s156, %s172
      %p174 = scmp.eq.s32.totalorder %s24, 0
      %p175 = por %p173, %p174
      %s176 = ssub.s32 %s26, %s40
      %p177 = scmp.eq.s32.totalorder %s176, 0
      %s179 = sadd.s32 %s178, 1
      %s180 = scalar_select %p177, %s178, %s179
      %p183 = pneg %p177
      %p184 = scmp.eq.s32.totalorder %s18, 7
      %p185 = por %p183, %p184
      %p186 = scmp.ne.s32.totalorder %s178, %s181
      %p187 = scmp.eq.s32.totalorder %s18, 0
      %p188 = por %p186, %p187
      %p189 = scmp.ne.s32.totalorder %s178, %s181
      %p190 = scmp.eq.s32.totalorder %s23, 7
      %p191 = por %p189, %p190
      %p192 = scmp.ne.s32.totalorder %s181, %s182
      %p193 = scmp.eq.s32.totalorder %s23, 0
      %p194 = por %p192, %p193
      %p195 = scmp.ne.s32.totalorder %s181, %s182
      %p196 = scmp.eq.s32.totalorder %s24, 7
      %p197 = por %p195, %p196
      %p199 = scmp.ne.s32.totalorder %s182, %s198
      %p200 = scmp.eq.s32.totalorder %s24, 0
      %p201 = por %p199, %p200
      %p202 = scmp.le.s32.totalorder 1, %s18
      %p203 = scmp.lt.s32.totalorder %s18, 9
      %p204 = pnand %p202, %p203
      %p205 = pneg %p204
      // Predicated region
      $region9: #{tpu_custom_call.1} parent=5 // pred_check
        _
      $region10: #{tpu_custom_call.1} parent=5 // pred_check_branch
        %207 = sbr.rel (%p204) target = $region12
      $region11: #{tpu_custom_call.1} parent=5 // pred_region
        %s208 = ssub.s32 %s18, 1
        // Predicated region
        $region13: #{tpu_custom_call.1} parent=11 // pred_check
          %p209 = pneg %p86
        $region14: #{tpu_custom_call.1} parent=11 // pred_check_branch
          %211 = sbr.rel (%p209) target = $region16
        $region15: #{tpu_custom_call.1} parent=11 // pred_region
          %s213 = ssub.s32 2048, 2048
          %214 = vsyncadd [#allocation9], %s213
          %s215 = sshll.u32 [#allocation8], 4
          %s216 = int_to_ptr.vmem [resolvable:$true] %s215
          %221 = dma.hbm_to_vmem [thread:$0]  %s1, 2048, %s216, [#allocation9], 64, 64, 4
        $region16: #{tpu_custom_call.1} parent=11 // pred_fallthru
          _
      $region12: #{tpu_custom_call.1} parent=5 // pred_fallthru
        _
      %p222 = scmp.lt.s32.totalorder %s18, 8
      // Predicated region
      $region17: #{tpu_custom_call.1} parent=5 // pred_check
        %p223 = pneg %p222
      $region18: #{tpu_custom_call.1} parent=5 // pred_check_branch
        %225 = sbr.rel (%p223) target = $region20
      $region19: #{tpu_custom_call.1} parent=5 // pred_region
        // Predicated region
        $region21: #{tpu_custom_call.1} parent=19 // pred_check
          %p226 = pneg %p59
        $region22: #{tpu_custom_call.1} parent=19 // pred_check_branch
          %228 = sbr.rel (%p226) target = $region24
        $region23: #{tpu_custom_call.1} parent=19 // pred_region
          %s229 = sand.u32 %s18, 1
          %s230 = scalar_lea.sflag [#allocation6], %s229
          %s231 = sand.u32 %s49, 1
          %s232 = smul.addr %s231, 64
          %s233 = scalar_lea.vmem [#allocation5], %s232
          %s234 = smul.u32 16, %s26
          %s236 = ssub.s32 1024, 1024
          %237 = vsyncadd %s230, %s236
          %s238 = smul.addr %s234, 2
          %s239 = sadd.s32 %s27, %s238
          %s240 = smul.addr %s239, 64
          %s241 = scalar_lea.hbm %s0, %s240
          %s242 = sshll.u32 %s233, 4
          %s243 = int_to_ptr.vmem [resolvable:$true] %s242
          %248 = dma.hbm_to_vmem [thread:$0]  %s241, 1024, %s243, %s230, 128, 64, 4
        $region24: #{tpu_custom_call.1} parent=19 // pred_fallthru
          _
        // Predicated region
        $region25: #{tpu_custom_call.1} parent=19 // pred_check
          %p249 = pneg %p110
        $region26: #{tpu_custom_call.1} parent=19 // pred_check_branch
          %251 = sbr.rel (%p249) target = $region28
        $region27: #{tpu_custom_call.1} parent=19 // pred_region
          %s252 = sand.u32 %s18, 1
          %s253 = scalar_lea.sflag [#allocation6], %s252
          %s254 = sand.u32 %s100, 1
          %s255 = smul.addr %s254, 128
          %s256 = scalar_lea.vmem [#allocation10], %s255
          %p257 = scmp.eq.s32.totalorder %s25, 1
          %s258 = scalar_select %p257, %s26, 0
          %s259 = smul.u32 16, %s258
          %s261 = ssub.s32 2048, 2048
          %262 = vsyncadd %s253, %s261
          %s263 = smul.addr %s259, 128
          %s264 = scalar_lea.hbm %s2, %s263
          %s265 = sshll.u32 %s256, 4
          %s266 = int_to_ptr.vmem [resolvable:$true] %s265
          %271 = dma.hbm_to_vmem [thread:$0]  %s264, 2048, %s266, %s253, 128, 128, 8
        $region28: #{tpu_custom_call.1} parent=19 // pred_fallthru
          _
        // Predicated region
        $region29: #{tpu_custom_call.1} parent=19 // pred_check
          %p272 = pneg %p136
        $region30: #{tpu_custom_call.1} parent=19 // pred_check_branch
          %274 = sbr.rel (%p272) target = $region32
        $region31: #{tpu_custom_call.1} parent=19 // pred_region
          %s275 = sand.u32 %s18, 1
          %s276 = scalar_lea.sflag [#allocation6], %s275
          %s277 = sand.u32 %s126, 1
          %s278 = smul.addr %s277, 64
          %s279 = scalar_lea.vmem [#allocation11], %s278
          %s281 = ssub.s32 1024, 1024
          %282 = vsyncadd %s276, %s281
          %s283 = smul.addr %s25, 16
          %s284 = smul.addr %s283, 64
          %s285 = scalar_lea.hbm %s3, %s284
          %s286 = sshll.u32 %s279, 4
          %s287 = int_to_ptr.vmem [resolvable:$true] %s286
          %292 = dma.hbm_to_vmem [thread:$0]  %s285, 1024, %s287, %s276, 64, 64, 4
        $region32: #{tpu_custom_call.1} parent=19 // pred_fallthru
          _
        // Predicated region
        $region33: #{tpu_custom_call.1} parent=19 // pred_check
          %p293 = pneg %p162
        $region34: #{tpu_custom_call.1} parent=19 // pred_check_branch
          %295 = sbr.rel (%p293) target = $region36
        $region35: #{tpu_custom_call.1} parent=19 // pred_region
          %p296 = scmp.lt.s32.totalorder %s25, 1
          %s297 = scalar_select %p296, %s25, 1
          %s298 = scalar_lea.vmem %s4, %s297
        $region36: #{tpu_custom_call.1} parent=19 // pred_fallthru
          _
      $region20: #{tpu_custom_call.1} parent=5 // pred_fallthru
        _
      %p299 = scmp.le.s32.totalorder 1, %s18
      %p300 = scmp.lt.s32.totalorder %s18, 9
      %p301 = pnand %p299, %p300
      %p302 = pneg %p301
      // Predicated region
      $region37: #{tpu_custom_call.1} parent=5 // pred_check
        _
      $region38: #{tpu_custom_call.1} parent=5 // pred_check_branch
        %304 = sbr.rel (%p301) target = $region40
      $region39: #{tpu_custom_call.1} parent=5 // pred_region
        %s305 = ssub.s32 %s18, 1
        %s306 = sand.u32 %s23, 1
        %s307 = scalar_lea.sflag [#allocation6], %s306
        %s308 = sand.u32 %s52, 1
        %s309 = smul.addr %s308, 64
        %s310 = scalar_lea.vmem [#allocation5], %s309
        // Predicated region
        $region41: #{tpu_custom_call.1} parent=39 // pred_check
          %p311 = pneg %p65
        $region42: #{tpu_custom_call.1} parent=39 // pred_check_branch
          %313 = sbr.rel (%p311) target = $region44
        $region43: #{tpu_custom_call.1} parent=39 // pred_region
          %314 = dma.done %s307, 1024
        $region44: #{tpu_custom_call.1} parent=39 // pred_fallthru
          _
        // Predicated region
        $region45: #{tpu_custom_call.1} parent=39 // pred_check
          %p315 = pneg %p86
        $region46: #{tpu_custom_call.1} parent=39 // pred_check_branch
          %317 = sbr.rel (%p315) target = $region48
        $region47: #{tpu_custom_call.1} parent=39 // pred_region
          %318 = dma.done [#allocation9], 2048
        $region48: #{tpu_custom_call.1} parent=39 // pred_fallthru
          _
        %s319 = sand.u32 %s23, 1
        %s320 = scalar_lea.sflag [#allocation6], %s319
        %s321 = sand.u32 %s103, 1
        %s322 = smul.addr %s321, 128
        %s323 = scalar_lea.vmem [#allocation10], %s322
        // Predicated region
        $region49: #{tpu_custom_call.1} parent=39 // pred_check
          %p324 = pneg %p116
        $region50: #{tpu_custom_call.1} parent=39 // pred_check_branch
          %326 = sbr.rel (%p324) target = $region52
        $region51: #{tpu_custom_call.1} parent=39 // pred_region
          %327 = dma.done %s320, 2048
        $region52: #{tpu_custom_call.1} parent=39 // pred_fallthru
          _
        %s328 = sand.u32 %s23, 1
        %s329 = scalar_lea.sflag [#allocation6], %s328
        %s330 = sand.u32 %s129, 1
        %s331 = smul.addr %s330, 64
        %s332 = scalar_lea.vmem [#allocation11], %s331
        // Predicated region
        $region53: #{tpu_custom_call.1} parent=39 // pred_check
          %p333 = pneg %p142
        $region54: #{tpu_custom_call.1} parent=39 // pred_check_branch
          %335 = sbr.rel (%p333) target = $region56
        $region55: #{tpu_custom_call.1} parent=39 // pred_region
          %336 = dma.done %s329, 1024
        $region56: #{tpu_custom_call.1} parent=39 // pred_fallthru
          _
        %s337 = sand.u32 %s23, 1
        %s338 = scalar_lea.sflag [#allocation6], %s337
        %s339 = sand.u32 %s52, 1
        %s340 = smul.addr %s339, 64
        %s341 = scalar_lea.vmem [#allocation5], %s340
        %p342 = pneg %p65
        %p343 = pneg %p62
        %p344 = pneg %p86
        %p345 = pneg %p83
        %s346 = sand.u32 %s23, 1
        %s347 = scalar_lea.sflag [#allocation6], %s346
        %s348 = sand.u32 %s103, 1
        %s349 = smul.addr %s348, 128
        %s350 = scalar_lea.vmem [#allocation10], %s349
        %p351 = pneg %p116
        %p352 = pneg %p113
        %s353 = sand.u32 %s23, 1
        %s354 = scalar_lea.sflag [#allocation6], %s353
        %s355 = sand.u32 %s129, 1
        %s356 = smul.addr %s355, 64
        %s357 = scalar_lea.vmem [#allocation11], %s356
        %p358 = pneg %p142
        %p359 = pneg %p139
        %p360 = scmp.lt.s32.totalorder %s28, 1
        %s361 = scalar_select %p360, %s28, 1
        %s362 = scalar_lea.vmem %s4, %s361
        %p363 = pneg %p168
        %p364 = pneg %p165
        %p365 = pneg %p194
        %p366 = pneg %p191
        %s367 = sand.u32 %s181, 1
        %s368 = scalar_lea.sflag [#allocation7], %s367
        %s369 = sand.u32 %s181, 1
        %s370 = smul.addr %s369, 128
        %s371 = scalar_lea.vmem [#allocation12], %s370
        %s372 = smul.u32 16, %s29
        %p373 = scmp.eq.s32.totalorder %s28, 1
        %s374 = scalar_select %p373, %s29, 0
        %s375 = smul.u32 16, %s374
        %p376 = scmp.lt.s32.totalorder %s28, 1
        %s377 = scalar_select %p376, %s28, 1
        %s378 = scalar_lea.vmem %s4, %s377
        %s379 = smul.u32 16, %s29
        %s381 = smul.u32 %s29, 128
        %s382 = smul.u32 %s30, 128
        %p383 = scmp.eq.s32.totalorder %s29, 0
        %p384 = scmp.eq.s32.totalorder %s30, 0
        %p385 = pnand %p383, %p384
        %p386 = pneg %p385
        // Predicated region
        $region57: #{tpu_custom_call.1} parent=39 // pred_check
          _
        $region58: #{tpu_custom_call.1} parent=39 // pred_check_branch
          %388 = sbr.rel (%p385) target = $region60
        $region59: #{tpu_custom_call.1} parent=39 // pred_region
          %v389 = vld [vmem:[%s332] sm:$0xf]
          %v390 = vld [vmem:[%s332 + $0x4] sm:$0xf]
          %v391 = vld [vmem:[%s332 + $0x8] sm:$0xf]
          %v392 = vld [vmem:[%s332 + $0xc] sm:$0xf]
          %v393 = vld [vmem:[%s332 + $0x10] sm:$0xf]
          %v394 = vld [vmem:[%s332 + $0x14] sm:$0xf]
          %v395 = vld [vmem:[%s332 + $0x18] sm:$0xf]
          %v396 = vld [vmem:[%s332 + $0x1c] sm:$0xf]
          %v397 = vld [vmem:[%s332 + $0x20] sm:$0xf]
          %v398 = vld [vmem:[%s332 + $0x24] sm:$0xf]
          %v399 = vld [vmem:[%s332 + $0x28] sm:$0xf]
          %v400 = vld [vmem:[%s332 + $0x2c] sm:$0xf]
          %v401 = vld [vmem:[%s332 + $0x30] sm:$0xf]
          %v402 = vld [vmem:[%s332 + $0x34] sm:$0xf]
          %v403 = vld [vmem:[%s332 + $0x38] sm:$0xf]
          %v404 = vld [vmem:[%s332 + $0x3c] sm:$0xf]
          %p405 = scmp.eq.s32.totalorder %s28, 0
          // Predicated region
          $region61: #{tpu_custom_call.1} parent=59 // pred_check
            %p406 = pneg %p405
          $region62: #{tpu_custom_call.1} parent=59 // pred_check_branch
            %408 = sbr.rel (%p406) target = $region64
          $region63: #{tpu_custom_call.1} parent=59 // pred_region
            %v409 = vld [vmem:[#allocation8] sm:$0xf]
            %v410 = vld [vmem:[#allocation8 + $0x4] sm:$0xf]
            %v411 = vld [vmem:[#allocation8 + $0x8] sm:$0xf]
            %v412 = vld [vmem:[#allocation8 + $0xc] sm:$0xf]
            %v413 = vld [vmem:[#allocation8 + $0x10] sm:$0xf]
            %v414 = vld [vmem:[#allocation8 + $0x14] sm:$0xf]
            %v415 = vld [vmem:[#allocation8 + $0x18] sm:$0xf]
            %v416 = vld [vmem:[#allocation8 + $0x1c] sm:$0xf]
            %v417 = vld [vmem:[#allocation8 + $0x20] sm:$0xf]
            %v418 = vld [vmem:[#allocation8 + $0x24] sm:$0xf]
            %v419 = vld [vmem:[#allocation8 + $0x28] sm:$0xf]
            %v420 = vld [vmem:[#allocation8 + $0x2c] sm:$0xf]
            %v421 = vld [vmem:[#allocation8 + $0x30] sm:$0xf]
            %v422 = vld [vmem:[#allocation8 + $0x34] sm:$0xf]
            %v423 = vld [vmem:[#allocation8 + $0x38] sm:$0xf]
            %v424 = vld [vmem:[#allocation8 + $0x3c] sm:$0xf]
            %v425 = vld [vmem:[#allocation8 + $0x40] sm:$0xf]
            %v426 = vld [vmem:[#allocation8 + $0x44] sm:$0xf]
            %v427 = vld [vmem:[#allocation8 + $0x48] sm:$0xf]
            %v428 = vld [vmem:[#allocation8 + $0x4c] sm:$0xf]
            %v429 = vld [vmem:[#allocation8 + $0x50] sm:$0xf]
            %v430 = vld [vmem:[#allocation8 + $0x54] sm:$0xf]
            %v431 = vld [vmem:[#allocation8 + $0x58] sm:$0xf]
            %v432 = vld [vmem:[#allocation8 + $0x5c] sm:$0xf]
            %v433 = vld [vmem:[#allocation8 + $0x60] sm:$0xf]
            %v434 = vld [vmem:[#allocation8 + $0x64] sm:$0xf]
            %v435 = vld [vmem:[#allocation8 + $0x68] sm:$0xf]
            %v436 = vld [vmem:[#allocation8 + $0x6c] sm:$0xf]
            %v437 = vld [vmem:[#allocation8 + $0x70] sm:$0xf]
            %v438 = vld [vmem:[#allocation8 + $0x74] sm:$0xf]
            %v439 = vld [vmem:[#allocation8 + $0x78] sm:$0xf]
            %v440 = vld [vmem:[#allocation8 + $0x7c] sm:$0xf]
            %v473 = vunpack.c.l.b16 %v409
            %v474 = vunpack.c.l.b16 %v410
            %v475 = vunpack.c.l.b16 %v411
            %v476 = vunpack.c.l.b16 %v412
            %v477 = vunpack.c.l.b16 %v413
            %v478 = vunpack.c.l.b16 %v414
            %v479 = vunpack.c.l.b16 %v415
            %v480 = vunpack.c.l.b16 %v416
            %v481 = vunpack.c.l.b16 %v417
            %v482 = vunpack.c.l.b16 %v418
            %v483 = vunpack.c.l.b16 %v419
            %v484 = vunpack.c.l.b16 %v420
            %v485 = vunpack.c.l.b16 %v421
            %v486 = vunpack.c.l.b16 %v422
            %v487 = vunpack.c.l.b16 %v423
            %v488 = vunpack.c.l.b16 %v424
            %v489 = vunpack.c.l.b16 %v425
            %v490 = vunpack.c.l.b16 %v426
            %v491 = vunpack.c.l.b16 %v427
            %v492 = vunpack.c.l.b16 %v428
            %v493 = vunpack.c.l.b16 %v429
            %v494 = vunpack.c.l.b16 %v430
            %v495 = vunpack.c.l.b16 %v431
            %v496 = vunpack.c.l.b16 %v432
            %v497 = vunpack.c.l.b16 %v433
            %v498 = vunpack.c.l.b16 %v434
            %v499 = vunpack.c.l.b16 %v435
            %v500 = vunpack.c.l.b16 %v436
            %v501 = vunpack.c.l.b16 %v437
            %v502 = vunpack.c.l.b16 %v438
            %v503 = vunpack.c.l.b16 %v439
            %v504 = vunpack.c.l.b16 %v440
            %v505 = vpack.c.b16 %v474, %v473
            %v506 = vpack.c.b16 %v476, %v475
            %v507 = vpack.c.b16 %v478, %v477
            %v508 = vpack.c.b16 %v480, %v479
            %v509 = vpack.c.b16 %v482, %v481
            %v510 = vpack.c.b16 %v484, %v483
            %v511 = vpack.c.b16 %v486, %v485
            %v512 = vpack.c.b16 %v488, %v487
            %v513 = vpack.c.b16 %v490, %v489
            %v514 = vpack.c.b16 %v492, %v491
            %v515 = vpack.c.b16 %v494, %v493
            %v516 = vpack.c.b16 %v496, %v495
            %v517 = vpack.c.b16 %v498, %v497
            %v518 = vpack.c.b16 %v500, %v499
            %v519 = vpack.c.b16 %v502, %v501
            %v520 = vpack.c.b16 %v504, %v503
            %v553 = vunpack.c.l.b16 %v389
            %v554 = vunpack.c.l.b16 %v390
            %v555 = vunpack.c.l.b16 %v391
            %v556 = vunpack.c.l.b16 %v392
            %v557 = vunpack.c.l.b16 %v393
            %v558 = vunpack.c.l.b16 %v394
            %v559 = vunpack.c.l.b16 %v395
            %v560 = vunpack.c.l.b16 %v396
            %v561 = vunpack.c.l.b16 %v397
            %v562 = vunpack.c.l.b16 %v398
            %v563 = vunpack.c.l.b16 %v399
            %v564 = vunpack.c.l.b16 %v400
            %v565 = vunpack.c.l.b16 %v401
            %v566 = vunpack.c.l.b16 %v402
            %v567 = vunpack.c.l.b16 %v403
            %v568 = vunpack.c.l.b16 %v404
            %v569 = vpack.c.b16 %v554, %v553
            %v570 = vpack.c.b16 %v556, %v555
            %v571 = vpack.c.b16 %v558, %v557
            %v572 = vpack.c.b16 %v560, %v559
            %v573 = vpack.c.b16 %v562, %v561
            %v574 = vpack.c.b16 %v564, %v563
            %v575 = vpack.c.b16 %v566, %v565
            %v576 = vpack.c.b16 %v568, %v567
            %585 = vmatprep.subr.bf16.mxu0 0
            %586 = vmatpush1.bf16.msra.mxu0 %v569
            %587 = vmatprep.subr.bf16.mxu0 0
            %588 = vmatpush1.bf16.msra.mxu0 %v570
            %589 = vmatprep.subr.bf16.mxu0 0
            %590 = vmatpush1.bf16.msra.mxu0 %v571
            %591 = vmatprep.subr.bf16.mxu0 0
            %592 = vmatpush1.bf16.msra.mxu0 %v572
            %593 = vmatprep.subr.bf16.mxu0 0
            %594 = vmatpush1.bf16.msra.mxu0 %v573
            %595 = vmatprep.subr.bf16.mxu0 0
            %596 = vmatpush1.bf16.msra.mxu0 %v574
            %597 = vmatprep.subr.bf16.mxu0 0
            %598 = vmatpush1.bf16.msra.mxu0 %v575
            %599 = vmatprep.subr.bf16.mxu0 0
            %600 = vmatpush1.bf16.msra.mxu0 %v576
            %601 = vmatprep.subr.bf16.mxu0 0
            %602 = vmatpush1.bf16.msra.mxu0 0
            %603 = vmatprep.subr.bf16.mxu0 0
            %604 = vmatpush1.bf16.msra.mxu0 0
            %605 = vmatprep.subr.bf16.mxu0 0
            %606 = vmatpush1.bf16.msra.mxu0 0
            %607 = vmatprep.subr.bf16.mxu0 0
            %608 = vmatpush1.bf16.msra.mxu0 0
            %609 = vmatprep.subr.bf16.mxu0 0
            %610 = vmatpush1.bf16.msra.mxu0 0
            %611 = vmatprep.subr.bf16.mxu0 0
            %612 = vmatpush1.bf16.msra.mxu0 0
            %613 = vmatprep.subr.bf16.mxu0 0
            %614 = vmatpush1.bf16.msra.mxu0 0
            %615 = vmatprep.subr.bf16.mxu0 0
            %616 = vmatpush1.bf16.msra.mxu0 0
            %617 = vmatprep.mubr.bf16.mxu0 0
            %618 = vmatmul.mubr.bf16.gmra.mrb[0].mxu0 %v505
            %v619 = vpop.f32.mrb[0].mxu0
            %v620 = vadd.f32 0.0, %v619
            %v621 = vpop.f32.mrb[0].mxu0
            %v622 = vpop.f32.mrb[0].mxu0
            %v623 = vadd.f32 0.0, %v622
            %v624 = vpop.f32.mrb[0].mxu0
            %625 = vmatprep.mubr.bf16.mxu0 0
            %626 = vmatmul.mubr.bf16.gmra.mrb[0].mxu0 %v506
            %v627 = vpop.f32.mrb[0].mxu0
            %v628 = vadd.f32 0.0, %v627
            %v629 = vpop.f32.mrb[0].mxu0
            %v630 = vpop.f32.mrb[0].mxu0
            %v631 = vadd.f32 0.0, %v630
            %v632 = vpop.f32.mrb[0].mxu0
            %633 = vmatprep.mubr.bf16.mxu0 0
            %634 = vmatmul.mubr.bf16.gmra.mrb[0].mxu0 %v507
            %v635 = vpop.f32.mrb[0].mxu0
            %v636 = vadd.f32 0.0, %v635
            %v637 = vpop.f32.mrb[0].mxu0
            %v638 = vpop.f32.mrb[0].mxu0
            %v639 = vadd.f32 0.0, %v638
            %v640 = vpop.f32.mrb[0].mxu0
            %641 = vmatprep.mubr.bf16.mxu0 0
            %642 = vmatmul.mubr.bf16.gmra.mrb[0].mxu0 %v508
            %v643 = vpop.f32.mrb[0].mxu0
            %v644 = vadd.f32 0.0, %v643
            %v645 = vpop.f32.mrb[0].mxu0
            %v646 = vpop.f32.mrb[0].mxu0
            %v647 = vadd.f32 0.0, %v646
            %v648 = vpop.f32.mrb[0].mxu0
            %649 = vmatprep.mubr.bf16.mxu0 0
            %650 = vmatmul.mubr.bf16.gmra.mrb[0].mxu0 %v509
            %v651 = vpop.f32.mrb[0].mxu0
            %v652 = vadd.f32 0.0, %v651
            %v653 = vpop.f32.mrb[0].mxu0
            %v654 = vpop.f32.mrb[0].mxu0
            %v655 = vadd.f32 0.0, %v654
            %v656 = vpop.f32.mrb[0].mxu0
            %657 = vmatprep.mubr.bf16.mxu0 0
            %658 = vmatmul.mubr.bf16.gmra.mrb[0].mxu0 %v510
            %v659 = vpop.f32.mrb[0].mxu0
            %v660 = vadd.f32 0.0, %v659
            %v661 = vpop.f32.mrb[0].mxu0
            %v662 = vpop.f32.mrb[0].mxu0
            %v663 = vadd.f32 0.0, %v662
            %v664 = vpop.f32.mrb[0].mxu0
            %665 = vmatprep.mubr.bf16.mxu0 0
            %666 = vmatmul.mubr.bf16.gmra.mrb[0].mxu0 %v511
            %v667 = vpop.f32.mrb[0].mxu0
            %v668 = vadd.f32 0.0, %v667
            %v669 = vpop.f32.mrb[0].mxu0
            %v670 = vpop.f32.mrb[0].mxu0
            %v671 = vadd.f32 0.0, %v670
            %v672 = vpop.f32.mrb[0].mxu0
            %673 = vmatprep.mubr.bf16.mxu0 0
            %674 = vmatmul.mubr.bf16.gmra.mrb[0].mxu0 %v512
            %v675 = vpop.f32.mrb[0].mxu0
            %v676 = vadd.f32 0.0, %v675
            %v677 = vpop.f32.mrb[0].mxu0
            %v678 = vpop.f32.mrb[0].mxu0
            %v679 = vadd.f32 0.0, %v678
            %v680 = vpop.f32.mrb[0].mxu0
            %681 = vmatprep.mubr.bf16.mxu0 0
            %682 = vmatmul.mubr.bf16.gmra.mrb[0].mxu0 %v513
            %v683 = vpop.f32.mrb[0].mxu0
            %v684 = vadd.f32 0.0, %v683
            %v685 = vpop.f32.mrb[0].mxu0
            %v686 = vpop.f32.mrb[0].mxu0
            %v687 = vadd.f32 0.0, %v686
            %v688 = vpop.f32.mrb[0].mxu0
            %689 = vmatprep.mubr.bf16.mxu0 0
            %690 = vmatmul.mubr.bf16.gmra.mrb[0].mxu0 %v514
            %v691 = vpop.f32.mrb[0].mxu0
            %v692 = vadd.f32 0.0, %v691
            %v693 = vpop.f32.mrb[0].mxu0
            %v694 = vpop.f32.mrb[0].mxu0
            %v695 = vadd.f32 0.0, %v694
            %v696 = vpop.f32.mrb[0].mxu0
            %697 = vmatprep.mubr.bf16.mxu0 0
            %698 = vmatmul.mubr.bf16.gmra.mrb[0].mxu0 %v515
            %v699 = vpop.f32.mrb[0].mxu0
            %v700 = vadd.f32 0.0, %v699
            %v701 = vpop.f32.mrb[0].mxu0
            %v702 = vpop.f32.mrb[0].mxu0
            %v703 = vadd.f32 0.0, %v702
            %v704 = vpop.f32.mrb[0].mxu0
            %705 = vmatprep.mubr.bf16.mxu0 0
            %706 = vmatmul.mubr.bf16.gmra.mrb[0].mxu0 %v516
            %v707 = vpop.f32.mrb[0].mxu0
            %v708 = vadd.f32 0.0, %v707
            %v709 = vpop.f32.mrb[0].mxu0
            %v710 = vpop.f32.mrb[0].mxu0
            %v711 = vadd.f32 0.0, %v710
            %v712 = vpop.f32.mrb[0].mxu0
            %713 = vmatprep.mubr.bf16.mxu0 0
            %714 = vmatmul.mubr.bf16.gmra.mrb[0].mxu0 %v517
            %v715 = vpop.f32.mrb[0].mxu0
            %v716 = vadd.f32 0.0, %v715
            %v717 = vpop.f32.mrb[0].mxu0
            %v718 = vpop.f32.mrb[0].mxu0
            %v719 = vadd.f32 0.0, %v718
            %v720 = vpop.f32.mrb[0].mxu0
            %721 = vmatprep.mubr.bf16.mxu0 0
            %722 = vmatmul.mubr.bf16.gmra.mrb[0].mxu0 %v518
            %v723 = vpop.f32.mrb[0].mxu0
            %v724 = vadd.f32 0.0, %v723
            %v725 = vpop.f32.mrb[0].mxu0
            %v726 = vpop.f32.mrb[0].mxu0
            %v727 = vadd.f32 0.0, %v726
            %v728 = vpop.f32.mrb[0].mxu0
            %729 = vmatprep.mubr.bf16.mxu0 0
            %730 = vmatmul.mubr.bf16.gmra.mrb[0].mxu0 %v519
            %v731 = vpop.f32.mrb[0].mxu0
            %v732 = vadd.f32 0.0, %v731
            %v733 = vpop.f32.mrb[0].mxu0
            %v734 = vpop.f32.mrb[0].mxu0
            %v735 = vadd.f32 0.0, %v734
            %v736 = vpop.f32.mrb[0].mxu0
            %737 = vmatprep.mubr.bf16.mxu0 0
            %738 = vmatmul.mubr.bf16.gmra.mrb[0].mxu0 %v520
            %v739 = vpop.f32.mrb[0].mxu0
            %v740 = vadd.f32 0.0, %v739
            %v741 = vpop.f32.mrb[0].mxu0
            %v742 = vpop.f32.mrb[0].mxu0
            %v743 = vadd.f32 0.0, %v742
            %v744 = vpop.f32.mrb[0].mxu0
            %745 = vdwg.mxu0
            %v746 = vpack.c.bf16 %v623, %v620
            %v747 = vpack.c.bf16 %v631, %v628
            %v748 = vpack.c.bf16 %v639, %v636
            %v749 = vpack.c.bf16 %v647, %v644
            %v750 = vpack.c.bf16 %v655, %v652
            %v751 = vpack.c.bf16 %v663, %v660
            %v752 = vpack.c.bf16 %v671, %v668
            %v753 = vpack.c.bf16 %v679, %v676
            %v754 = vpack.c.bf16 %v687, %v684
            %v755 = vpack.c.bf16 %v695, %v692
            %v756 = vpack.c.bf16 %v703, %v700
            %v757 = vpack.c.bf16 %v711, %v708
            %v758 = vpack.c.bf16 %v719, %v716
            %v759 = vpack.c.bf16 %v727, %v724
            %v760 = vpack.c.bf16 %v735, %v732
            %v761 = vpack.c.bf16 %v743, %v740
            %762 = vst [vmem:[#allocation3] sm:$0xff] %v746
            %763 = vst [vmem:[#allocation3 + $0x8] sm:$0xff] %v747
            %764 = vst [vmem:[#allocation3 + $0x10] sm:$0xff] %v748
            %765 = vst [vmem:[#allocation3 + $0x18] sm:$0xff] %v749
            %766 = vst [vmem:[#allocation3 + $0x20] sm:$0xff] %v750
            %767 = vst [vmem:[#allocation3 + $0x28] sm:$0xff] %v751
            %768 = vst [vmem:[#allocation3 + $0x30] sm:$0xff] %v752
            %769 = vst [vmem:[#allocation3 + $0x38] sm:$0xff] %v753
            %770 = vst [vmem:[#allocation3 + $0x40] sm:$0xff] %v754
            %771 = vst [vmem:[#allocation3 + $0x48] sm:$0xff] %v755
            %772 = vst [vmem:[#allocation3 + $0x50] sm:$0xff] %v756
            %773 = vst [vmem:[#allocation3 + $0x58] sm:$0xff] %v757
            %774 = vst [vmem:[#allocation3 + $0x60] sm:$0xff] %v758
            %775 = vst [vmem:[#allocation3 + $0x68] sm:$0xff] %v759
            %776 = vst [vmem:[#allocation3 + $0x70] sm:$0xff] %v760
            %777 = vst [vmem:[#allocation3 + $0x78] sm:$0xff] %v761
          $region64: #{tpu_custom_call.1} parent=59 // pred_fallthru
            _
          %p778 = scmp.ne.s32.totalorder %s28, 0
          // Predicated region
          $region65: #{tpu_custom_call.1} parent=59 // pred_check
            %p779 = pneg %p778
          $region66: #{tpu_custom_call.1} parent=59 // pred_check_branch
            %781 = sbr.rel (%p779) target = $region68
          $region67: #{tpu_custom_call.1} parent=59 // pred_region
            %v782 = vld [vmem:[#allocation2] sm:$0xff]
            %v783 = vld [vmem:[#allocation2 + $0x8] sm:$0xff]
            %v784 = vld [vmem:[#allocation2 + $0x10] sm:$0xff]
            %v785 = vld [vmem:[#allocation2 + $0x18] sm:$0xff]
            %v786 = vld [vmem:[#allocation2 + $0x20] sm:$0xff]
            %v787 = vld [vmem:[#allocation2 + $0x28] sm:$0xff]
            %v788 = vld [vmem:[#allocation2 + $0x30] sm:$0xff]
            %v789 = vld [vmem:[#allocation2 + $0x38] sm:$0xff]
            %v790 = vld [vmem:[#allocation2 + $0x40] sm:$0xff]
            %v791 = vld [vmem:[#allocation2 + $0x48] sm:$0xff]
            %v792 = vld [vmem:[#allocation2 + $0x50] sm:$0xff]
            %v793 = vld [vmem:[#allocation2 + $0x58] sm:$0xff]
            %v794 = vld [vmem:[#allocation2 + $0x60] sm:$0xff]
            %v795 = vld [vmem:[#allocation2 + $0x68] sm:$0xff]
            %v796 = vld [vmem:[#allocation2 + $0x70] sm:$0xff]
            %v797 = vld [vmem:[#allocation2 + $0x78] sm:$0xff]
            %v798 = vld [vmem:[#allocation2 + $0x80] sm:$0xff]
            %v799 = vld [vmem:[#allocation2 + $0x88] sm:$0xff]
            %v800 = vld [vmem:[#allocation2 + $0x90] sm:$0xff]
            %v801 = vld [vmem:[#allocation2 + $0x98] sm:$0xff]
            %v802 = vld [vmem:[#allocation2 + $0xa0] sm:$0xff]
            %v803 = vld [vmem:[#allocation2 + $0xa8] sm:$0xff]
            %v804 = vld [vmem:[#allocation2 + $0xb0] sm:$0xff]
            %v805 = vld [vmem:[#allocation2 + $0xb8] sm:$0xff]
            %v806 = vld [vmem:[#allocation2 + $0xc0] sm:$0xff]
            %v807 = vld [vmem:[#allocation2 + $0xc8] sm:$0xff]
            %v808 = vld [vmem:[#allocation2 + $0xd0] sm:$0xff]
            %v809 = vld [vmem:[#allocation2 + $0xd8] sm:$0xff]
            %v810 = vld [vmem:[#allocation2 + $0xe0] sm:$0xff]
            %v811 = vld [vmem:[#allocation2 + $0xe8] sm:$0xff]
            %v812 = vld [vmem:[#allocation2 + $0xf0] sm:$0xff]
            %v813 = vld [vmem:[#allocation2 + $0xf8] sm:$0xff]
            %v814 = vpack.c.bf16 %v783, %v782
            %v815 = vpack.c.bf16 %v785, %v784
            %v816 = vpack.c.bf16 %v787, %v786
            %v817 = vpack.c.bf16 %v789, %v788
            %v818 = vpack.c.bf16 %v791, %v790
            %v819 = vpack.c.bf16 %v793, %v792
            %v820 = vpack.c.bf16 %v795, %v794
            %v821 = vpack.c.bf16 %v797, %v796
            %v822 = vpack.c.bf16 %v799, %v798
            %v823 = vpack.c.bf16 %v801, %v800
            %v824 = vpack.c.bf16 %v803, %v802
            %v825 = vpack.c.bf16 %v805, %v804
            %v826 = vpack.c.bf16 %v807, %v806
            %v827 = vpack.c.bf16 %v809, %v808
            %v828 = vpack.c.bf16 %v811, %v810
            %v829 = vpack.c.bf16 %v813, %v812
            %v846 = vunpack.c.l.b16 %v389
            %v847 = vunpack.c.l.b16 %v390
            %v848 = vunpack.c.l.b16 %v391
            %v849 = vunpack.c.l.b16 %v392
            %v850 = vunpack.c.l.b16 %v393
            %v851 = vunpack.c.l.b16 %v394
            %v852 = vunpack.c.l.b16 %v395
            %v853 = vunpack.c.l.b16 %v396
            %v854 = vunpack.c.l.b16 %v397
            %v855 = vunpack.c.l.b16 %v398
            %v856 = vunpack.c.l.b16 %v399
            %v857 = vunpack.c.l.b16 %v400
            %v858 = vunpack.c.l.b16 %v401
            %v859 = vunpack.c.l.b16 %v402
            %v860 = vunpack.c.l.b16 %v403
            %v861 = vunpack.c.l.b16 %v404
            %v862 = vpack.c.b16 %v847, %v846
            %v863 = vpack.c.b16 %v849, %v848
            %v864 = vpack.c.b16 %v851, %v850
            %v865 = vpack.c.b16 %v853, %v852
            %v866 = vpack.c.b16 %v855, %v854
            %v867 = vpack.c.b16 %v857, %v856
            %v868 = vpack.c.b16 %v859, %v858
            %v869 = vpack.c.b16 %v861, %v860
            %878 = vmatprep.subr.bf16.mxu0 0
            %879 = vmatpush1.bf16.msra.mxu0 %v862
            %880 = vmatprep.subr.bf16.mxu0 0
            %881 = vmatpush1.bf16.msra.mxu0 %v863
            %882 = vmatprep.subr.bf16.mxu0 0
            %883 = vmatpush1.bf16.msra.mxu0 %v864
            %884 = vmatprep.subr.bf16.mxu0 0
            %885 = vmatpush1.bf16.msra.mxu0 %v865
            %886 = vmatprep.subr.bf16.mxu0 0
            %887 = vmatpush1.bf16.msra.mxu0 %v866
            %888 = vmatprep.subr.bf16.mxu0 0
            %889 = vmatpush1.bf16.msra.mxu0 %v867
            %890 = vmatprep.subr.bf16.mxu0 0
            %891 = vmatpush1.bf16.msra.mxu0 %v868
            %892 = vmatprep.subr.bf16.mxu0 0
            %893 = vmatpush1.bf16.msra.mxu0 %v869
            %894 = vmatprep.subr.bf16.mxu0 0
            %895 = vmatpush1.bf16.msra.mxu0 0
            %896 = vmatprep.subr.bf16.mxu0 0
            %897 = vmatpush1.bf16.msra.mxu0 0
            %898 = vmatprep.subr.bf16.mxu0 0
            %899 = vmatpush1.bf16.msra.mxu0 0
            %900 = vmatprep.subr.bf16.mxu0 0
            %901 = vmatpush1.bf16.msra.mxu0 0
            %902 = vmatprep.subr.bf16.mxu0 0
            %903 = vmatpush1.bf16.msra.mxu0 0
            %904 = vmatprep.subr.bf16.mxu0 0
            %905 = vmatpush1.bf16.msra.mxu0 0
            %906 = vmatprep.subr.bf16.mxu0 0
            %907 = vmatpush1.bf16.msra.mxu0 0
            %908 = vmatprep.subr.bf16.mxu0 0
            %909 = vmatpush1.bf16.msra.mxu0 0
            %910 = vmatprep.mubr.bf16.mxu0 0
            %911 = vmatmul.mubr.bf16.gmra.mrb[0].mxu0 %v814
            %v912 = vpop.f32.mrb[0].mxu0
            %v913 = vadd.f32 0.0, %v912
            %v914 = vpop.f32.mrb[0].mxu0
            %v915 = vpop.f32.mrb[0].mxu0
            %v916 = vadd.f32 0.0, %v915
            %v917 = vpop.f32.mrb[0].mxu0
            %918 = vmatprep.mubr.bf16.mxu0 0
            %919 = vmatmul.mubr.bf16.gmra.mrb[0].mxu0 %v815
            %v920 = vpop.f32.mrb[0].mxu0
            %v921 = vadd.f32 0.0, %v920
            %v922 = vpop.f32.mrb[0].mxu0
            %v923 = vpop.f32.mrb[0].mxu0
            %v924 = vadd.f32 0.0, %v923
            %v925 = vpop.f32.mrb[0].mxu0
            %926 = vmatprep.mubr.bf16.mxu0 0
            %927 = vmatmul.mubr.bf16.gmra.mrb[0].mxu0 %v816
            %v928 = vpop.f32.mrb[0].mxu0
            %v929 = vadd.f32 0.0, %v928
            %v930 = vpop.f32.mrb[0].mxu0
            %v931 = vpop.f32.mrb[0].mxu0
            %v932 = vadd.f32 0.0, %v931
            %v933 = vpop.f32.mrb[0].mxu0
            %934 = vmatprep.mubr.bf16.mxu0 0
            %935 = vmatmul.mubr.bf16.gmra.mrb[0].mxu0 %v817
            %v936 = vpop.f32.mrb[0].mxu0
            %v937 = vadd.f32 0.0, %v936
            %v938 = vpop.f32.mrb[0].mxu0
            %v939 = vpop.f32.mrb[0].mxu0
            %v940 = vadd.f32 0.0, %v939
            %v941 = vpop.f32.mrb[0].mxu0
            %942 = vmatprep.mubr.bf16.mxu0 0
            %943 = vmatmul.mubr.bf16.gmra.mrb[0].mxu0 %v818
            %v944 = vpop.f32.mrb[0].mxu0
            %v945 = vadd.f32 0.0, %v944
            %v946 = vpop.f32.mrb[0].mxu0
            %v947 = vpop.f32.mrb[0].mxu0
            %v948 = vadd.f32 0.0, %v947
            %v949 = vpop.f32.mrb[0].mxu0
            %950 = vmatprep.mubr.bf16.mxu0 0
            %951 = vmatmul.mubr.bf16.gmra.mrb[0].mxu0 %v819
            %v952 = vpop.f32.mrb[0].mxu0
            %v953 = vadd.f32 0.0, %v952
            %v954 = vpop.f32.mrb[0].mxu0
            %v955 = vpop.f32.mrb[0].mxu0
            %v956 = vadd.f32 0.0, %v955
            %v957 = vpop.f32.mrb[0].mxu0
            %958 = vmatprep.mubr.bf16.mxu0 0
            %959 = vmatmul.mubr.bf16.gmra.mrb[0].mxu0 %v820
            %v960 = vpop.f32.mrb[0].mxu0
            %v961 = vadd.f32 0.0, %v960
            %v962 = vpop.f32.mrb[0].mxu0
            %v963 = vpop.f32.mrb[0].mxu0
            %v964 = vadd.f32 0.0, %v963
            %v965 = vpop.f32.mrb[0].mxu0
            %966 = vmatprep.mubr.bf16.mxu0 0
            %967 = vmatmul.mubr.bf16.gmra.mrb[0].mxu0 %v821
            %v968 = vpop.f32.mrb[0].mxu0
            %v969 = vadd.f32 0.0, %v968
            %v970 = vpop.f32.mrb[0].mxu0
            %v971 = vpop.f32.mrb[0].mxu0
            %v972 = vadd.f32 0.0, %v971
            %v973 = vpop.f32.mrb[0].mxu0
            %974 = vmatprep.mubr.bf16.mxu0 0
            %975 = vmatmul.mubr.bf16.gmra.mrb[0].mxu0 %v822
            %v976 = vpop.f32.mrb[0].mxu0
            %v977 = vadd.f32 0.0, %v976
            %v978 = vpop.f32.mrb[0].mxu0
            %v979 = vpop.f32.mrb[0].mxu0
            %v980 = vadd.f32 0.0, %v979
            %v981 = vpop.f32.mrb[0].mxu0
            %982 = vmatprep.mubr.bf16.mxu0 0
            %983 = vmatmul.mubr.bf16.gmra.mrb[0].mxu0 %v823
            %v984 = vpop.f32.mrb[0].mxu0
            %v985 = vadd.f32 0.0, %v984
            %v986 = vpop.f32.mrb[0].mxu0
            %v987 = vpop.f32.mrb[0].mxu0
            %v988 = vadd.f32 0.0, %v987
            %v989 = vpop.f32.mrb[0].mxu0
            %990 = vmatprep.mubr.bf16.mxu0 0
            %991 = vmatmul.mubr.bf16.gmra.mrb[0].mxu0 %v824
            %v992 = vpop.f32.mrb[0].mxu0
            %v993 = vadd.f32 0.0, %v992
            %v994 = vpop.f32.mrb[0].mxu0
            %v995 = vpop.f32.mrb[0].mxu0
            %v996 = vadd.f32 0.0, %v995
            %v997 = vpop.f32.mrb[0].mxu0
            %998 = vmatprep.mubr.bf16.mxu0 0
            %999 = vmatmul.mubr.bf16.gmra.mrb[0].mxu0 %v825
            %v1000 = vpop.f32.mrb[0].mxu0
            %v1001 = vadd.f32 0.0, %v1000
            %v1002 = vpop.f32.mrb[0].mxu0
            %v1003 = vpop.f32.mrb[0].mxu0
            %v1004 = vadd.f32 0.0, %v1003
            %v1005 = vpop.f32.mrb[0].mxu0
            %1006 = vmatprep.mubr.bf16.mxu0 0
            %1007 = vmatmul.mubr.bf16.gmra.mrb[0].mxu0 %v826
            %v1008 = vpop.f32.mrb[0].mxu0
            %v1009 = vadd.f32 0.0, %v1008
            %v1010 = vpop.f32.mrb[0].mxu0
            %v1011 = vpop.f32.mrb[0].mxu0
            %v1012 = vadd.f32 0.0, %v1011
            %v1013 = vpop.f32.mrb[0].mxu0
            %1014 = vmatprep.mubr.bf16.mxu0 0
            %1015 = vmatmul.mubr.bf16.gmra.mrb[0].mxu0 %v827
            %v1016 = vpop.f32.mrb[0].mxu0
            %v1017 = vadd.f32 0.0, %v1016
            %v1018 = vpop.f32.mrb[0].mxu0
            %v1019 = vpop.f32.mrb[0].mxu0
            %v1020 = vadd.f32 0.0, %v1019
            %v1021 = vpop.f32.mrb[0].mxu0
            %1022 = vmatprep.mubr.bf16.mxu0 0
            %1023 = vmatmul.mubr.bf16.gmra.mrb[0].mxu0 %v828
            %v1024 = vpop.f32.mrb[0].mxu0
            %v1025 = vadd.f32 0.0, %v1024
            %v1026 = vpop.f32.mrb[0].mxu0
            %v1027 = vpop.f32.mrb[0].mxu0
            %v1028 = vadd.f32 0.0, %v1027
            %v1029 = vpop.f32.mrb[0].mxu0
            %1030 = vmatprep.mubr.bf16.mxu0 0
            %1031 = vmatmul.mubr.bf16.gmra.mrb[0].mxu0 %v829
            %v1032 = vpop.f32.mrb[0].mxu0
            %v1033 = vadd.f32 0.0, %v1032
            %v1034 = vpop.f32.mrb[0].mxu0
            %v1035 = vpop.f32.mrb[0].mxu0
            %v1036 = vadd.f32 0.0, %v1035
            %v1037 = vpop.f32.mrb[0].mxu0
            %1038 = vdwg.mxu0
            %v1039 = vpack.c.bf16 %v916, %v913
            %v1040 = vpack.c.bf16 %v924, %v921
            %v1041 = vpack.c.bf16 %v932, %v929
            %v1042 = vpack.c.bf16 %v940, %v937
            %v1043 = vpack.c.bf16 %v948, %v945
            %v1044 = vpack.c.bf16 %v956, %v953
            %v1045 = vpack.c.bf16 %v964, %v961
            %v1046 = vpack.c.bf16 %v972, %v969
            %v1047 = vpack.c.bf16 %v980, %v977
            %v1048 = vpack.c.bf16 %v988, %v985
            %v1049 = vpack.c.bf16 %v996, %v993
            %v1050 = vpack.c.bf16 %v1004, %v1001
            %v1051 = vpack.c.bf16 %v1012, %v1009
            %v1052 = vpack.c.bf16 %v1020, %v1017
            %v1053 = vpack.c.bf16 %v1028, %v1025
            %v1054 = vpack.c.bf16 %v1036, %v1033
            %1055 = vst [vmem:[#allocation3] sm:$0xff] %v1039
            %1056 = vst [vmem:[#allocation3 + $0x8] sm:$0xff] %v1040
            %1057 = vst [vmem:[#allocation3 + $0x10] sm:$0xff] %v1041
            %1058 = vst [vmem:[#allocation3 + $0x18] sm:$0xff] %v1042
            %1059 = vst [vmem:[#allocation3 + $0x20] sm:$0xff] %v1043
            %1060 = vst [vmem:[#allocation3 + $0x28] sm:$0xff] %v1044
            %1061 = vst [vmem:[#allocation3 + $0x30] sm:$0xff] %v1045
            %1062 = vst [vmem:[#allocation3 + $0x38] sm:$0xff] %v1046
            %1063 = vst [vmem:[#allocation3 + $0x40] sm:$0xff] %v1047
            %1064 = vst [vmem:[#allocation3 + $0x48] sm:$0xff] %v1048
            %1065 = vst [vmem:[#allocation3 + $0x50] sm:$0xff] %v1049
            %1066 = vst [vmem:[#allocation3 + $0x58] sm:$0xff] %v1050
            %1067 = vst [vmem:[#allocation3 + $0x60] sm:$0xff] %v1051
            %1068 = vst [vmem:[#allocation3 + $0x68] sm:$0xff] %v1052
            %1069 = vst [vmem:[#allocation3 + $0x70] sm:$0xff] %v1053
            %1070 = vst [vmem:[#allocation3 + $0x78] sm:$0xff] %v1054
          $region68: #{tpu_custom_call.1} parent=59 // pred_fallthru
            _
        $region60: #{tpu_custom_call.1} parent=39 // pred_fallthru
          _
        // Predicated region
        $region69: #{tpu_custom_call.1} parent=39 // pred_check
          %p1071 = pneg %p384
        $region70: #{tpu_custom_call.1} parent=39 // pred_check_branch
          %1073 = sbr.rel (%p1071) target = $region72
        $region71: #{tpu_custom_call.1} parent=39 // pred_region
          %1074 = vst [vmem:[#allocation4] sm:$0xff] 0.0
          %1075 = vst [vmem:[#allocation4 + $0x8] sm:$0xff] 0.0
          %1076 = vst [vmem:[#allocation4 + $0x10] sm:$0xff] 0.0
          %1077 = vst [vmem:[#allocation4 + $0x18] sm:$0xff] 0.0
          %1078 = vst [vmem:[#allocation4 + $0x20] sm:$0xff] 0.0
          %1079 = vst [vmem:[#allocation4 + $0x28] sm:$0xff] 0.0
          %1080 = vst [vmem:[#allocation4 + $0x30] sm:$0xff] 0.0
          %1081 = vst [vmem:[#allocation4 + $0x38] sm:$0xff] 0.0
          %1082 = vst [vmem:[#allocation4 + $0x40] sm:$0xff] 0.0
          %1083 = vst [vmem:[#allocation4 + $0x48] sm:$0xff] 0.0
          %1084 = vst [vmem:[#allocation4 + $0x50] sm:$0xff] 0.0
          %1085 = vst [vmem:[#allocation4 + $0x58] sm:$0xff] 0.0
          %1086 = vst [vmem:[#allocation4 + $0x60] sm:$0xff] 0.0
          %1087 = vst [vmem:[#allocation4 + $0x68] sm:$0xff] 0.0
          %1088 = vst [vmem:[#allocation4 + $0x70] sm:$0xff] 0.0
          %1089 = vst [vmem:[#allocation4 + $0x78] sm:$0xff] 0.0
        $region72: #{tpu_custom_call.1} parent=39 // pred_fallthru
          _
        %v1090 = vld [vmem:[#allocation4] sm:$0xff]
        %v1091 = vld [vmem:[#allocation4 + $0x8] sm:$0xff]
        %v1092 = vld [vmem:[#allocation4 + $0x10] sm:$0xff]
        %v1093 = vld [vmem:[#allocation4 + $0x18] sm:$0xff]
        %v1094 = vld [vmem:[#allocation4 + $0x20] sm:$0xff]
        %v1095 = vld [vmem:[#allocation4 + $0x28] sm:$0xff]
        %v1096 = vld [vmem:[#allocation4 + $0x30] sm:$0xff]
        %v1097 = vld [vmem:[#allocation4 + $0x38] sm:$0xff]
        %v1098 = vld [vmem:[#allocation4 + $0x40] sm:$0xff]
        %v1099 = vld [vmem:[#allocation4 + $0x48] sm:$0xff]
        %v1100 = vld [vmem:[#allocation4 + $0x50] sm:$0xff]
        %v1101 = vld [vmem:[#allocation4 + $0x58] sm:$0xff]
        %v1102 = vld [vmem:[#allocation4 + $0x60] sm:$0xff]
        %v1103 = vld [vmem:[#allocation4 + $0x68] sm:$0xff]
        %v1104 = vld [vmem:[#allocation4 + $0x70] sm:$0xff]
        %v1105 = vld [vmem:[#allocation4 + $0x78] sm:$0xff]
        %v1106 = vld [vmem:[%s310] sm:$0xf]
        %v1107 = vld [vmem:[%s310 + $0x4] sm:$0xf]
        %v1108 = vld [vmem:[%s310 + $0x8] sm:$0xf]
        %v1109 = vld [vmem:[%s310 + $0xc] sm:$0xf]
        %v1110 = vld [vmem:[%s310 + $0x10] sm:$0xf]
        %v1111 = vld [vmem:[%s310 + $0x14] sm:$0xf]
        %v1112 = vld [vmem:[%s310 + $0x18] sm:$0xf]
        %v1113 = vld [vmem:[%s310 + $0x1c] sm:$0xf]
        %v1114 = vld [vmem:[%s310 + $0x20] sm:$0xf]
        %v1115 = vld [vmem:[%s310 + $0x24] sm:$0xf]
        %v1116 = vld [vmem:[%s310 + $0x28] sm:$0xf]
        %v1117 = vld [vmem:[%s310 + $0x2c] sm:$0xf]
        %v1118 = vld [vmem:[%s310 + $0x30] sm:$0xf]
        %v1119 = vld [vmem:[%s310 + $0x34] sm:$0xf]
        %v1120 = vld [vmem:[%s310 + $0x38] sm:$0xf]
        %v1121 = vld [vmem:[%s310 + $0x3c] sm:$0xf]
        %s1122 = sshra.s32 %s382, 4
        %s1123 = sand.u32 %s382, 15
        %s1124 = smul.addr %s1122, 8
        %s1125 = scalar_lea.vmem [#allocation3], %s1124
        %v1126 = vld [vmem:[%s1125] sm:$0xff]
        %v1127 = vld [vmem:[%s1125 + $0x8] sm:$0xff]
        %v1128 = vld [vmem:[%s1125 + $0x10] sm:$0xff]
        %v1129 = vld [vmem:[%s1125 + $0x18] sm:$0xff]
        %v1130 = vld [vmem:[%s1125 + $0x20] sm:$0xff]
        %v1131 = vld [vmem:[%s1125 + $0x28] sm:$0xff]
        %v1132 = vld [vmem:[%s1125 + $0x30] sm:$0xff]
        %v1133 = vld [vmem:[%s1125 + $0x38] sm:$0xff]
        %v1150 = vunpack.c.l.b16 %v1106
        %v1151 = vunpack.c.l.b16 %v1107
        %v1152 = vunpack.c.l.b16 %v1108
        %v1153 = vunpack.c.l.b16 %v1109
        %v1154 = vunpack.c.l.b16 %v1110
        %v1155 = vunpack.c.l.b16 %v1111
        %v1156 = vunpack.c.l.b16 %v1112
        %v1157 = vunpack.c.l.b16 %v1113
        %v1158 = vunpack.c.l.b16 %v1114
        %v1159 = vunpack.c.l.b16 %v1115
        %v1160 = vunpack.c.l.b16 %v1116
        %v1161 = vunpack.c.l.b16 %v1117
        %v1162 = vunpack.c.l.b16 %v1118
        %v1163 = vunpack.c.l.b16 %v1119
        %v1164 = vunpack.c.l.b16 %v1120
        %v1165 = vunpack.c.l.b16 %v1121
        %v1166 = vpack.c.b16 %v1151, %v1150
        %v1167 = vpack.c.b16 %v1153, %v1152
        %v1168 = vpack.c.b16 %v1155, %v1154
        %v1169 = vpack.c.b16 %v1157, %v1156
        %v1170 = vpack.c.b16 %v1159, %v1158
        %v1171 = vpack.c.b16 %v1161, %v1160
        %v1172 = vpack.c.b16 %v1163, %v1162
        %v1173 = vpack.c.b16 %v1165, %v1164
        %1182 = vmatprep.subr.bf16.mxu0 0
        %1183 = vmatpush1.bf16.msra.mxu0 %v1126
        %1184 = vmatprep.subr.bf16.mxu0 0
        %1185 = vmatpush1.bf16.msra.mxu0 %v1127
        %1186 = vmatprep.subr.bf16.mxu0 0
        %1187 = vmatpush1.bf16.msra.mxu0 %v1128
        %1188 = vmatprep.subr.bf16.mxu0 0
        %1189 = vmatpush1.bf16.msra.mxu0 %v1129
        %1190 = vmatprep.subr.bf16.mxu0 0
        %1191 = vmatpush1.bf16.msra.mxu0 %v1130
        %1192 = vmatprep.subr.bf16.mxu0 0
        %1193 = vmatpush1.bf16.msra.mxu0 %v1131
        %1194 = vmatprep.subr.bf16.mxu0 0
        %1195 = vmatpush1.bf16.msra.mxu0 %v1132
        %1196 = vmatprep.subr.bf16.mxu0 0
        %1197 = vmatpush1.bf16.msra.mxu0 %v1133
        %1198 = vmatprep.subr.bf16.mxu0 0
        %1199 = vmatpush1.bf16.msra.mxu0 0
        %1200 = vmatprep.subr.bf16.mxu0 0
        %1201 = vmatpush1.bf16.msra.mxu0 0
        %1202 = vmatprep.subr.bf16.mxu0 0
        %1203 = vmatpush1.bf16.msra.mxu0 0
        %1204 = vmatprep.subr.bf16.mxu0 0
        %1205 = vmatpush1.bf16.msra.mxu0 0
        %1206 = vmatprep.subr.bf16.mxu0 0
        %1207 = vmatpush1.bf16.msra.mxu0 0
        %1208 = vmatprep.subr.bf16.mxu0 0
        %1209 = vmatpush1.bf16.msra.mxu0 0
        %1210 = vmatprep.subr.bf16.mxu0 0
        %1211 = vmatpush1.bf16.msra.mxu0 0
        %1212 = vmatprep.subr.bf16.mxu0 0
        %1213 = vmatpush1.bf16.msra.mxu0 0
        %1214 = vmatprep.mubr.bf16.mxu0 0
        %1215 = vmatmul.mubr.bf16.gmra.mrb[0].mxu0 %v1166
        %v1216 = vpop.f32.mrb[0].mxu0
        %v1217 = vadd.f32 0.0, %v1216
        %v1218 = vpop.f32.mrb[0].mxu0
        %v1219 = vpop.f32.mrb[0].mxu0
        %v1220 = vadd.f32 0.0, %v1219
        %v1221 = vpop.f32.mrb[0].mxu0
        %1222 = vmatprep.mubr.bf16.mxu0 0
        %1223 = vmatmul.mubr.bf16.gmra.mrb[0].mxu0 %v1167
        %v1224 = vpop.f32.mrb[0].mxu0
        %v1225 = vadd.f32 0.0, %v1224
        %v1226 = vpop.f32.mrb[0].mxu0
        %v1227 = vpop.f32.mrb[0].mxu0
        %v1228 = vadd.f32 0.0, %v1227
        %v1229 = vpop.f32.mrb[0].mxu0
        %1230 = vmatprep.mubr.bf16.mxu0 0
        %1231 = vmatmul.mubr.bf16.gmra.mrb[0].mxu0 %v1168
        %v1232 = vpop.f32.mrb[0].mxu0
        %v1233 = vadd.f32 0.0, %v1232
        %v1234 = vpop.f32.mrb[0].mxu0
        %v1235 = vpop.f32.mrb[0].mxu0
        %v1236 = vadd.f32 0.0, %v1235
        %v1237 = vpop.f32.mrb[0].mxu0
        %1238 = vmatprep.mubr.bf16.mxu0 0
        %1239 = vmatmul.mubr.bf16.gmra.mrb[0].mxu0 %v1169
        %v1240 = vpop.f32.mrb[0].mxu0
        %v1241 = vadd.f32 0.0, %v1240
        %v1242 = vpop.f32.mrb[0].mxu0
        %v1243 = vpop.f32.mrb[0].mxu0
        %v1244 = vadd.f32 0.0, %v1243
        %v1245 = vpop.f32.mrb[0].mxu0
        %1246 = vmatprep.mubr.bf16.mxu0 0
        %1247 = vmatmul.mubr.bf16.gmra.mrb[0].mxu0 %v1170
        %v1248 = vpop.f32.mrb[0].mxu0
        %v1249 = vadd.f32 0.0, %v1248
        %v1250 = vpop.f32.mrb[0].mxu0
        %v1251 = vpop.f32.mrb[0].mxu0
        %v1252 = vadd.f32 0.0, %v1251
        %v1253 = vpop.f32.mrb[0].mxu0
        %1254 = vmatprep.mubr.bf16.mxu0 0
        %1255 = vmatmul.mubr.bf16.gmra.mrb[0].mxu0 %v1171
        %v1256 = vpop.f32.mrb[0].mxu0
        %v1257 = vadd.f32 0.0, %v1256
        %v1258 = vpop.f32.mrb[0].mxu0
        %v1259 = vpop.f32.mrb[0].mxu0
        %v1260 = vadd.f32 0.0, %v1259
        %v1261 = vpop.f32.mrb[0].mxu0
        %1262 = vmatprep.mubr.bf16.mxu0 0
        %1263 = vmatmul.mubr.bf16.gmra.mrb[0].mxu0 %v1172
        %v1264 = vpop.f32.mrb[0].mxu0
        %v1265 = vadd.f32 0.0, %v1264
        %v1266 = vpop.f32.mrb[0].mxu0
        %v1267 = vpop.f32.mrb[0].mxu0
        %v1268 = vadd.f32 0.0, %v1267
        %v1269 = vpop.f32.mrb[0].mxu0
        %1270 = vmatprep.mubr.bf16.mxu0 0
        %1271 = vmatmul.mubr.bf16.gmra.mrb[0].mxu0 %v1173
        %v1272 = vpop.f32.mrb[0].mxu0
        %v1273 = vadd.f32 0.0, %v1272
        %v1274 = vpop.f32.mrb[0].mxu0
        %v1275 = vpop.f32.mrb[0].mxu0
        %v1276 = vadd.f32 0.0, %v1275
        %v1277 = vpop.f32.mrb[0].mxu0
        %1278 = vdwg.mxu0
        %v1279 = vadd.f32 %v1090, %v1217
        %v1280 = vadd.f32 %v1091, %v1220
        %v1281 = vadd.f32 %v1092, %v1225
        %v1282 = vadd.f32 %v1093, %v1228
        %v1283 = vadd.f32 %v1094, %v1233
        %v1284 = vadd.f32 %v1095, %v1236
        %v1285 = vadd.f32 %v1096, %v1241
        %v1286 = vadd.f32 %v1097, %v1244
        %v1287 = vadd.f32 %v1098, %v1249
        %v1288 = vadd.f32 %v1099, %v1252
        %v1289 = vadd.f32 %v1100, %v1257
        %v1290 = vadd.f32 %v1101, %v1260
        %v1291 = vadd.f32 %v1102, %v1265
        %v1292 = vadd.f32 %v1103, %v1268
        %v1293 = vadd.f32 %v1104, %v1273
        %v1294 = vadd.f32 %v1105, %v1276
        %1295 = vst [vmem:[#allocation4] sm:$0xff] %v1279
        %1296 = vst [vmem:[#allocation4 + $0x8] sm:$0xff] %v1280
        %1297 = vst [vmem:[#allocation4 + $0x10] sm:$0xff] %v1281
        %1298 = vst [vmem:[#allocation4 + $0x18] sm:$0xff] %v1282
        %1299 = vst [vmem:[#allocation4 + $0x20] sm:$0xff] %v1283
        %1300 = vst [vmem:[#allocation4 + $0x28] sm:$0xff] %v1284
        %1301 = vst [vmem:[#allocation4 + $0x30] sm:$0xff] %v1285
        %1302 = vst [vmem:[#allocation4 + $0x38] sm:$0xff] %v1286
        %1303 = vst [vmem:[#allocation4 + $0x40] sm:$0xff] %v1287
        %1304 = vst [vmem:[#allocation4 + $0x48] sm:$0xff] %v1288
        %1305 = vst [vmem:[#allocation4 + $0x50] sm:$0xff] %v1289
        %1306 = vst [vmem:[#allocation4 + $0x58] sm:$0xff] %v1290
        %1307 = vst [vmem:[#allocation4 + $0x60] sm:$0xff] %v1291
        %1308 = vst [vmem:[#allocation4 + $0x68] sm:$0xff] %v1292
        %1309 = vst [vmem:[#allocation4 + $0x70] sm:$0xff] %v1293
        %1310 = vst [vmem:[#allocation4 + $0x78] sm:$0xff] %v1294
        %p1311 = scmp.eq.s32.totalorder %s30, 1
        // Predicated region
        $region73: #{tpu_custom_call.1} parent=39 // pred_check
          %p1312 = pneg %p1311
        $region74: #{tpu_custom_call.1} parent=39 // pred_check_branch
          %1314 = sbr.rel (%p1312) target = $region76
        $region75: #{tpu_custom_call.1} parent=39 // pred_region
          %v1315 = vld [vmem:[#allocation4] sm:$0xff]
          %v1316 = vld [vmem:[#allocation4 + $0x8] sm:$0xff]
          %v1317 = vld [vmem:[#allocation4 + $0x10] sm:$0xff]
          %v1318 = vld [vmem:[#allocation4 + $0x18] sm:$0xff]
          %v1319 = vld [vmem:[#allocation4 + $0x20] sm:$0xff]
          %v1320 = vld [vmem:[#allocation4 + $0x28] sm:$0xff]
          %v1321 = vld [vmem:[#allocation4 + $0x30] sm:$0xff]
          %v1322 = vld [vmem:[#allocation4 + $0x38] sm:$0xff]
          %v1323 = vld [vmem:[#allocation4 + $0x40] sm:$0xff]
          %v1324 = vld [vmem:[#allocation4 + $0x48] sm:$0xff]
          %v1325 = vld [vmem:[#allocation4 + $0x50] sm:$0xff]
          %v1326 = vld [vmem:[#allocation4 + $0x58] sm:$0xff]
          %v1327 = vld [vmem:[#allocation4 + $0x60] sm:$0xff]
          %v1328 = vld [vmem:[#allocation4 + $0x68] sm:$0xff]
          %v1329 = vld [vmem:[#allocation4 + $0x70] sm:$0xff]
          %v1330 = vld [vmem:[#allocation4 + $0x78] sm:$0xff]
          %v1331 = vld [vmem:[%s378] sm:$0x1]
          %v1333 = vlaneseq
          %v1334 = vshrl.u32 %v1333, 7
          %v1335 = vsub.s32 0, %v1334
          %v1336 = vrot.slane %v1331, %v1335
          %v1338 = vadd.f32 %v1315, %v1336
          %v1339 = vadd.f32 %v1316, %v1336
          %v1340 = vadd.f32 %v1317, %v1336
          %v1341 = vadd.f32 %v1318, %v1336
          %v1342 = vadd.f32 %v1319, %v1336
          %v1343 = vadd.f32 %v1320, %v1336
          %v1344 = vadd.f32 %v1321, %v1336
          %v1345 = vadd.f32 %v1322, %v1336
          %v1346 = vadd.f32 %v1323, %v1336
          %v1347 = vadd.f32 %v1324, %v1336
          %v1348 = vadd.f32 %v1325, %v1336
          %v1349 = vadd.f32 %v1326, %v1336
          %v1350 = vadd.f32 %v1327, %v1336
          %v1351 = vadd.f32 %v1328, %v1336
          %v1352 = vadd.f32 %v1329, %v1336
          %v1353 = vadd.f32 %v1330, %v1336
          %s1354 = scalar_lea.vmem [#allocation2], %s381
          %1355 = vst [vmem:[%s1354] sm:$0xff] %v1338
          %1356 = vst [vmem:[%s1354 + $0x8] sm:$0xff] %v1339
          %1357 = vst [vmem:[%s1354 + $0x10] sm:$0xff] %v1340
          %1358 = vst [vmem:[%s1354 + $0x18] sm:$0xff] %v1341
          %1359 = vst [vmem:[%s1354 + $0x20] sm:$0xff] %v1342
          %1360 = vst [vmem:[%s1354 + $0x28] sm:$0xff] %v1343
          %1361 = vst [vmem:[%s1354 + $0x30] sm:$0xff] %v1344
          %1362 = vst [vmem:[%s1354 + $0x38] sm:$0xff] %v1345
          %1363 = vst [vmem:[%s1354 + $0x40] sm:$0xff] %v1346
          %1364 = vst [vmem:[%s1354 + $0x48] sm:$0xff] %v1347
          %1365 = vst [vmem:[%s1354 + $0x50] sm:$0xff] %v1348
          %1366 = vst [vmem:[%s1354 + $0x58] sm:$0xff] %v1349
          %1367 = vst [vmem:[%s1354 + $0x60] sm:$0xff] %v1350
          %1368 = vst [vmem:[%s1354 + $0x68] sm:$0xff] %v1351
          %1369 = vst [vmem:[%s1354 + $0x70] sm:$0xff] %v1352
          %1370 = vst [vmem:[%s1354 + $0x78] sm:$0xff] %v1353
          %p1371 = scmp.eq.s32.totalorder %s28, 1
          // Predicated region
          $region77: #{tpu_custom_call.1} parent=75 // pred_check
            %p1372 = pneg %p1371
          $region78: #{tpu_custom_call.1} parent=75 // pred_check_branch
            %1374 = sbr.rel (%p1372) target = $region80
          $region79: #{tpu_custom_call.1} parent=75 // pred_region
            %v1375 = vld [vmem:[%s323] sm:$0xff]
            %v1376 = vld [vmem:[%s323 + $0x8] sm:$0xff]
            %v1377 = vld [vmem:[%s323 + $0x10] sm:$0xff]
            %v1378 = vld [vmem:[%s323 + $0x18] sm:$0xff]
            %v1379 = vld [vmem:[%s323 + $0x20] sm:$0xff]
            %v1380 = vld [vmem:[%s323 + $0x28] sm:$0xff]
            %v1381 = vld [vmem:[%s323 + $0x30] sm:$0xff]
            %v1382 = vld [vmem:[%s323 + $0x38] sm:$0xff]
            %v1383 = vld [vmem:[%s323 + $0x40] sm:$0xff]
            %v1384 = vld [vmem:[%s323 + $0x48] sm:$0xff]
            %v1385 = vld [vmem:[%s323 + $0x50] sm:$0xff]
            %v1386 = vld [vmem:[%s323 + $0x58] sm:$0xff]
            %v1387 = vld [vmem:[%s323 + $0x60] sm:$0xff]
            %v1388 = vld [vmem:[%s323 + $0x68] sm:$0xff]
            %v1389 = vld [vmem:[%s323 + $0x70] sm:$0xff]
            %v1390 = vld [vmem:[%s323 + $0x78] sm:$0xff]
            %v1391 = vadd.f32 %v1338, %v1375
            %v1392 = vadd.f32 %v1339, %v1376
            %v1393 = vadd.f32 %v1340, %v1377
            %v1394 = vadd.f32 %v1341, %v1378
            %v1395 = vadd.f32 %v1342, %v1379
            %v1396 = vadd.f32 %v1343, %v1380
            %v1397 = vadd.f32 %v1344, %v1381
            %v1398 = vadd.f32 %v1345, %v1382
            %v1399 = vadd.f32 %v1346, %v1383
            %v1400 = vadd.f32 %v1347, %v1384
            %v1401 = vadd.f32 %v1348, %v1385
            %v1402 = vadd.f32 %v1349, %v1386
            %v1403 = vadd.f32 %v1350, %v1387
            %v1404 = vadd.f32 %v1351, %v1388
            %v1405 = vadd.f32 %v1352, %v1389
            %v1406 = vadd.f32 %v1353, %v1390
            %1407 = vst [vmem:[%s371] sm:$0xff] %v1391
            %1408 = vst [vmem:[%s371 + $0x8] sm:$0xff] %v1392
            %1409 = vst [vmem:[%s371 + $0x10] sm:$0xff] %v1393
            %1410 = vst [vmem:[%s371 + $0x18] sm:$0xff] %v1394
            %1411 = vst [vmem:[%s371 + $0x20] sm:$0xff] %v1395
            %1412 = vst [vmem:[%s371 + $0x28] sm:$0xff] %v1396
            %1413 = vst [vmem:[%s371 + $0x30] sm:$0xff] %v1397
            %1414 = vst [vmem:[%s371 + $0x38] sm:$0xff] %v1398
            %1415 = vst [vmem:[%s371 + $0x40] sm:$0xff] %v1399
            %1416 = vst [vmem:[%s371 + $0x48] sm:$0xff] %v1400
            %1417 = vst [vmem:[%s371 + $0x50] sm:$0xff] %v1401
            %1418 = vst [vmem:[%s371 + $0x58] sm:$0xff] %v1402
            %1419 = vst [vmem:[%s371 + $0x60] sm:$0xff] %v1403
            %1420 = vst [vmem:[%s371 + $0x68] sm:$0xff] %v1404
            %1421 = vst [vmem:[%s371 + $0x70] sm:$0xff] %v1405
            %1422 = vst [vmem:[%s371 + $0x78] sm:$0xff] %v1406
          $region80: #{tpu_custom_call.1} parent=75 // pred_fallthru
            _
          %p1423 = scmp.ne.s32.totalorder %s28, 1
          // Predicated region
          $region81: #{tpu_custom_call.1} parent=75 // pred_check
            %p1424 = pneg %p1423
          $region82: #{tpu_custom_call.1} parent=75 // pred_check_branch
            %1426 = sbr.rel (%p1424) target = $region84
          $region83: #{tpu_custom_call.1} parent=75 // pred_region
            %1427 = vst [vmem:[%s371] sm:$0xff] %v1338
            %1428 = vst [vmem:[%s371 + $0x8] sm:$0xff] %v1339
            %1429 = vst [vmem:[%s371 + $0x10] sm:$0xff] %v1340
            %1430 = vst [vmem:[%s371 + $0x18] sm:$0xff] %v1341
            %1431 = vst [vmem:[%s371 + $0x20] sm:$0xff] %v1342
            %1432 = vst [vmem:[%s371 + $0x28] sm:$0xff] %v1343
            %1433 = vst [vmem:[%s371 + $0x30] sm:$0xff] %v1344
            %1434 = vst [vmem:[%s371 + $0x38] sm:$0xff] %v1345
            %1435 = vst [vmem:[%s371 + $0x40] sm:$0xff] %v1346
            %1436 = vst [vmem:[%s371 + $0x48] sm:$0xff] %v1347
            %1437 = vst [vmem:[%s371 + $0x50] sm:$0xff] %v1348
            %1438 = vst [vmem:[%s371 + $0x58] sm:$0xff] %v1349
            %1439 = vst [vmem:[%s371 + $0x60] sm:$0xff] %v1350
            %1440 = vst [vmem:[%s371 + $0x68] sm:$0xff] %v1351
            %1441 = vst [vmem:[%s371 + $0x70] sm:$0xff] %v1352
            %1442 = vst [vmem:[%s371 + $0x78] sm:$0xff] %v1353
          $region84: #{tpu_custom_call.1} parent=75 // pred_fallthru
            _
        $region76: #{tpu_custom_call.1} parent=39 // pred_fallthru
          _
        %s1443 = sand.u32 %s181, 1
        %s1444 = scalar_lea.sflag [#allocation7], %s1443
        %s1445 = sand.u32 %s181, 1
        %s1446 = smul.addr %s1445, 128
        %s1447 = scalar_lea.vmem [#allocation12], %s1446
        // Predicated region
        $region85: #{tpu_custom_call.1} parent=39 // pred_check
          %p1448 = pneg %p191
        $region86: #{tpu_custom_call.1} parent=39 // pred_check_branch
          %1450 = sbr.rel (%p1448) target = $region88
        $region87: #{tpu_custom_call.1} parent=39 // pred_region
          %s1451 = smul.u32 16, %s29
          %s1453 = ssub.s32 2048, 2048
          %1454 = vsyncadd %s1444, %s1453
          %s1455 = smul.addr %s1451, 128
          %s1456 = scalar_lea.hbm %s5, %s1455
          %s1457 = sshll.u32 %s1447, 4
          %s1458 = int_to_ptr.vmem [resolvable:$true] %s1457
          %1463 = dma.vmem_to_hbm [thread:$0]  %s1458, 2048, %s1456, %s1444, 128, 128, 8
        $region88: #{tpu_custom_call.1} parent=39 // pred_fallthru
          _
      $region40: #{tpu_custom_call.1} parent=5 // pred_fallthru
        _
      %p1464 = scmp.le.s32.totalorder 2, %s18
      // Predicated region
      $region89: #{tpu_custom_call.1} parent=5 // pred_check
        %p1465 = pneg %p1464
      $region90: #{tpu_custom_call.1} parent=5 // pred_check_branch
        %1467 = sbr.rel (%p1465) target = $region92
      $region91: #{tpu_custom_call.1} parent=5 // pred_region
        %s1468 = ssub.s32 %s18, 2
        // Predicated region
        $region93: #{tpu_custom_call.1} parent=91 // pred_check
          %p1469 = pneg %p197
        $region94: #{tpu_custom_call.1} parent=91 // pred_check_branch
          %1471 = sbr.rel (%p1469) target = $region96
        $region95: #{tpu_custom_call.1} parent=91 // pred_region
          %s1472 = sand.u32 %s182, 1
          %s1473 = scalar_lea.sflag [#allocation7], %s1472
          %s1474 = sand.u32 %s182, 1
          %s1475 = smul.addr %s1474, 128
          %s1476 = scalar_lea.vmem [#allocation12], %s1475
          %1477 = dma.done %s1473, 2048
        $region96: #{tpu_custom_call.1} parent=91 // pred_fallthru
          _
      $region92: #{tpu_custom_call.1} parent=5 // pred_fallthru
        _
    $region6: #{tpu_custom_call.1} parent=1 // loop_footer
      %s22 = sadd.s32 1, %s18
    $region7: #{tpu_custom_call.1} parent=1 // loop_footer_branch
      %17 = sbr.rel target = $region3
    $region8: #{tpu_custom_call.1} parent=1 // loop_exit
      _
    %1478 = vsyncpa [#allocation6], 1
    %s1479 = scalar_lea.sflag [#allocation6], 1
    %1480 = vsyncpa %s1479, 1
    %1481 = vsyncpa [#allocation9], 1
    %1482 = vsyncpa [#allocation7], 1
    %s1483 = scalar_lea.sflag [#allocation7], 1
    %1484 = vsyncpa %s1483, 1

</llo_original>
